<compile_context>
chip_gen: v5e
topology: v5e:2x2
jax: 0.10.0
libtpu: 0.0.40
codegen_flags: <defaults>
</compile_context>

<pallas_src>
import math
from functools import partial

import jax
import jax.numpy as jnp
import numpy as np
from jax.experimental import pallas as pl
from jax.experimental.pallas import tpu as pltpu


def _round_up(v: int, m: int) -> int:
    return (v + m - 1) // m * m


def _lru_kernel(x_ref, mask_ref, win_ref, bin_ref, lre_ref, lim_ref,
                wre_ref, wim_ref, bout_ref, lnw_ref, lnb_ref,
                out_ref, hre, him,
                *, L, E, H_pad, max_block_unroll):
    """One batch tile (tb whole sequences) of the LRU layer.

    hre / him hold Re(h) / Im(h) as f32, shape (G, 8, H_pad); rows are
    time-major (b*L + t), so scan blocks of length l <= L never cross a tile
    group boundary.
    """
    G = hre.shape[0]
    n_rows = G * 8
    cdt = win_ref.dtype

    # ---- fused complex in_proj (gamma folded into weights/bias) -----------
    h0 = jnp.dot(x_ref[...].astype(cdt), win_ref[...],
                 preferred_element_type=jnp.float32) + bin_ref[...]
    hre[...] = h0[:, :H_pad].reshape(G, 8, H_pad)
    him[...] = h0[:, H_pad:].reshape(G, 8, H_pad)

    n_levels = L.bit_length() - 1                         # log2(L)

    # ---- small levels (l = 2, 4, 8): blocks live inside one 8-row tile ----
    for i in range(1, min(n_levels, 3) + 1):
        l = 1 << i
        half = l // 2
        tre = lre_ref[0:half, :]                          # (half, H_pad)
        tim = lim_ref[0:half, :]
        for s in range(0, 8, l):
            cr = s + half - 1
            m = mask_ref[:, cr:cr + 1, :]                 # (G, 1, 1)
            c_re = hre[:, cr:cr + 1, :] * m               # (G, 1, H_pad)
            c_im = him[:, cr:cr + 1, :] * m
            u_re = tre * c_re - tim * c_im                # (G, half, H_pad)
            u_im = tre * c_im + tim * c_re
            hre[:, s + half:s + l, :] = hre[:, s + half:s + l, :] + u_re
            him[:, s + half:s + l, :] = him[:, s + half:s + l, :] + u_im

    # ---- big levels (l >= 16): touch ONLY the second half of each block ---
    for i in range(4, n_levels + 1):
        l = 1 << i
        half = l // 2
        gb = l // 8                                       # tiles per block
        hb = gb // 2                                      # tiles per half block
        nb = G // gb                                      # blocks in this tile
        tre = lre_ref[0:half, :].reshape(hb, 8, H_pad)    # lamb^1..lamb^half
        tim = lim_ref[0:half, :].reshape(hb, 8, H_pad)

        def _block(b, tre=tre, tim=tim, gb=gb, hb=hb):
            base = b * gb
            ci = base + hb - 1                            # tile of carry row
            m = mask_ref[ci, 7:8, :]                      # (1, 1)
            c_re = hre[ci, 7:8, :] * m                    # (1, H_pad)
            c_im = him[ci, 7:8, :] * m
            u_re = tre * c_re - tim * c_im                # (hb, 8, H_pad)
            u_im = tre * c_im + tim * c_re
            sl = pl.ds(base + hb, hb)                     # second-half tiles
            hre[sl] = hre[sl] + u_re
            him[sl] = him[sl] + u_im

        if nb <= max_block_unroll:
            for b in range(nb):
                _block(b)
        else:
            def _loop_body(b, carry):
                _block(b)
                return carry
            jax.lax.fori_loop(0, nb, _loop_body, 0)

    # ---- out_proj (real part), residual, LayerNorm -------------------------
    h_re = hre[...].reshape(n_rows, H_pad).astype(cdt)
    h_im = him[...].reshape(n_rows, H_pad).astype(cdt)
    y = (jnp.dot(h_re, wre_ref[...], preferred_element_type=jnp.float32)
         - jnp.dot(h_im, wim_ref[...], preferred_element_type=jnp.float32)
         + bout_ref[...])
    # TODO(synk): nn.Dropout(p=0.1) implemented as identity (eval semantics).
    xo = y + x_ref[...]                                   # f32 residual

    E_pad = xo.shape[-1]
    inv_e = 1.0 / E
    mean = jnp.sum(xo, axis=-1, keepdims=True) * inv_e
    lane = jax.lax.broadcasted_iota(jnp.int32, (1, E_pad), 1)
    xc = (xo - mean) * (lane < E).astype(jnp.float32)     # padded lanes -> 0
    var = jnp.sum(xc * xc, axis=-1, keepdims=True) * inv_e
    inv = jax.lax.rsqrt(var + 1e-5)
    out_ref[...] = xc * inv * lnw_ref[...] + lnb_ref[...]


def _vmem_capacity_bytes():
    try:
        return int(pltpu.get_tpu_info().vmem_capacity_bytes)
    except Exception:
        return 64 << 20        # conservative (v7x-sized) fallback


def _plan_tiles(B, L, E_pad, H_pad, w_itemsize, budget_bytes):
    """Pick the batch-tile size tb and an explicit, physically-valid VMEM limit."""
    W = 2 * H_pad
    capacity = _vmem_capacity_bytes()
    if budget_bytes is None:
        budget_bytes = int(0.70 * capacity)
    budget_bytes = min(budget_bytes, int(0.80 * capacity))

    per_seq = (2 * L * E_pad * 4          # x tile (f32), double buffered
               + 2 * L * E_pad * 4        # out tile (f32), double buffered
               + 2 * L * 128 * 4          # mask tile (lane padded), x2 buffers
               + 2 * L * H_pad * 4)       # Re + Im hidden scratch (single)
    fixed = (E_pad * W * w_itemsize       # in_proj weight   (single buffered)
             + 2 * H_pad * E_pad * w_itemsize   # out_proj Re/Im weights
             + 2 * (L // 2) * H_pad * 4         # compact lambda-power tables
             + (W + 3 * E_pad) * 4)             # biases + LayerNorm params

    cands = [t for t in range(1, B + 1) if B % t == 0 and (t * L) % 8 == 0]
    if not cands:
        raise ValueError(f"No valid batch tile: B={B}, L={L} (B*L % 8 != 0).")

    fits = [t for t in cands if fixed + t * per_seq <= budget_bytes]
    tb = None
    for min_steps in (4, 2, 1):           # >=4 steps: 2 per TC on v7x megacore
        good = [t for t in fits if B // t >= min_steps]
        if good:
            tb = max(good)
            break
    if tb is None:
        tb = min(cands)                   # re-plan to smallest tile

    est = fixed + tb * per_seq
    hard_cap = int(0.85 * capacity)
    if est + (2 << 20) > hard_cap:
        raise ValueError(
            f"LRU kernel needs ~{est >> 20} MiB of VMEM even at the smallest "
            f"batch tile (tb={tb}), exceeding ~85% of physical VMEM "
            f"({capacity >> 20} MiB). Reduce L or d_model.")
    vmem_limit = int(1.25 * est) + (2 << 20)
    vmem_limit = max(16 << 20, min(vmem_limit, hard_cap))
    return tb, vmem_limit


def lru_forward(x, mask, params, *, matmul_dtype=jnp.bfloat16,
                vmem_budget_bytes=None, max_block_unroll=8):
    """Parallel-scan path of LRULayer.forward (prev=None, L>1) -> (out, None).

    # TODO(synk): the recurrent branches of LRULayer.forward (prev is not None
    # or L == 1) are a single complex GEMV per token; not implemented here.
    """
    B, L, E = x.shape
    H = 2 * E
    assert L > 1 and (L & (L - 1)) == 0, "L must be a power of two > 1"
    N = B * L
    assert N % 8 == 0, "B*L must be a multiple of 8 (TPU sublane tile)"

    E_pad = _round_up(E, 128)
    H_pad = _round_up(H, 128)
    W = 2 * H_pad
    f32 = jnp.float32

    nu = jnp.exp(params['params_log'][0])          # (H,)
    theta = jnp.exp(params['params_log'][1])
    gamma = jnp.exp(params['params_log'][2])

    # Fold gamma into the in_proj weights/bias (removes two (N,H) VPU mults).
    win_re = params['win_re'] * gamma[:, None]     # (H, E)
    win_im = params['win_im'] * gamma[:, None]
    bin_re = params['bin_re'] * gamma
    bin_im = params['bin_im'] * gamma

    # Fused in_proj weight (E_pad, W): cols [0,H) = Re, [H_pad, H_pad+H) = Im.
    w_in = jnp.zeros((E_pad, W), f32)
    w_in = w_in.at[:E, :H].set(win_re.T).at[:E, H_pad:H_pad + H].set(win_im.T)
    b_in = jnp.zeros((1, W), f32)
    b_in = b_in.at[0, :H].set(bin_re).at[0, H_pad:H_pad + H].set(bin_im)

    # out_proj: Re(h @ wout.T) = h_re @ wout_re.T - h_im @ wout_im.T.
    w_out_re = jnp.zeros((H_pad, E_pad), f32).at[:H, :E].set(params['wout_re'].T)
    w_out_im = jnp.zeros((H_pad, E_pad), f32).at[:H, :E].set(params['wout_im'].T)
    b_out = jnp.zeros((1, E_pad), f32).at[0, :E].set(params['bout_re'])
    ln_w = jnp.zeros((1, E_pad), f32).at[0, :E].set(params['ln_w'])
    ln_b = jnp.zeros((1, E_pad), f32).at[0, :E].set(params['ln_b'])

    # Compact lambda-power tables: row k-1 = lamb^k, k = 1..L/2.
    ks = jnp.arange(1, L // 2 + 1, dtype=f32)[:, None]          # (L/2, 1)
    mag = jnp.exp(-ks * nu[None, :])
    lre = jnp.zeros((L // 2, H_pad), f32).at[:, :H].set(
        mag * jnp.cos(ks * theta[None, :]))
    lim = jnp.zeros((L // 2, H_pad), f32).at[:, :H].set(
        mag * jnp.sin(ks * theta[None, :]))

    # Inputs: time-major 2-D view, zero-padded lanes.  x stays f32 so the
    # residual is exact; it is cast to matmul_dtype inside the kernel.
    x2 = jnp.zeros((N, E_pad), f32).at[:, :E].set(x.reshape(N, E).astype(f32))
    mask3 = mask.reshape(N // 8, 8, 1).astype(f32)
    w_in = w_in.astype(matmul_dtype)
    w_out_re = w_out_re.astype(matmul_dtype)
    w_out_im = w_out_im.astype(matmul_dtype)

    itemsize = jnp.dtype(matmul_dtype).itemsize
    tb, vmem_limit = _plan_tiles(B, L, E_pad, H_pad, itemsize,
                                 vmem_budget_bytes)
    n_rows = tb * L
    G = n_rows // 8

    kernel = partial(_lru_kernel, L=L, E=E, H_pad=H_pad,
                     max_block_unroll=max_block_unroll)

    def _const2d(shape):
        # Grid-invariant operand: never re-fetched, single VMEM buffer.
        return pl.BlockSpec(shape, lambda i: (0, 0),
                            pipeline_mode=pl.Buffered(1))

    out = pl.pallas_call(
        kernel,
        out_shape=jax.ShapeDtypeStruct((N, E_pad), f32),
        grid=(B // tb,),
        in_specs=[
            pl.BlockSpec((n_rows, E_pad), lambda i: (i, 0)),     # x (f32)
            pl.BlockSpec((G, 8, 1), lambda i: (i, 0, 0)),        # mask
            _const2d((E_pad, W)),                                # w_in
            _const2d((1, W)),                                    # b_in
            _const2d((L // 2, H_pad)),                           # lre table
            _const2d((L // 2, H_pad)),                           # lim table
            _const2d((H_pad, E_pad)),                            # w_out_re
            _const2d((H_pad, E_pad)),                            # w_out_im
            _const2d((1, E_pad)),                                # b_out
            _const2d((1, E_pad)),                                # ln_w
            _const2d((1, E_pad)),                                # ln_b
        ],
        out_specs=pl.BlockSpec((n_rows, E_pad), lambda i: (i, 0)),
        scratch_shapes=[pltpu.VMEM((G, 8, H_pad), f32),          # Re(h)
                        pltpu.VMEM((G, 8, H_pad), f32)],         # Im(h)
        compiler_params=pltpu.CompilerParams(
            dimension_semantics=("parallel",),
            vmem_limit_bytes=vmem_limit),
    )(x2, mask3, w_in, b_in, lre, lim, w_out_re, w_out_im, b_out, ln_w, ln_b)

    return out[:, :E].reshape(B, L, E), None   # `now` is None on this path


def init_params(key, d_model, r_min=0.8, r_max=0.99):
    E, H = d_model, 2 * d_model
    k = jax.random.split(key, 6)
    u1 = jax.random.uniform(k[0], (H,), dtype=jnp.float32)
    u2 = jax.random.uniform(k[1], (H,), dtype=jnp.float32)
    nu_log = jnp.log(-0.5 * jnp.log(u1 * (r_max ** 2 - r_min ** 2) + r_min ** 2))
    theta_log = jnp.log(u2 * 2.0 * jnp.pi)
    gamma_log = jnp.log(jnp.sqrt(1.0 - jnp.exp(-2.0 * jnp.exp(nu_log))))
    params_log = jnp.stack([nu_log, theta_log, gamma_log])       # (3, H)

    def linear_init(kk, out_dim, in_dim):
        bound = 1.0 / math.sqrt(in_dim)
        kw, kb = jax.random.split(kk)
        w = jax.random.uniform(kw, (out_dim, in_dim), minval=-bound,
                               maxval=bound, dtype=jnp.float32)
        b = jax.random.uniform(kb, (out_dim,), minval=-bound,
                               maxval=bound, dtype=jnp.float32)
        return w, b

    win_re, bin_re = linear_init(k[2], H, E)
    win_im, bin_im = linear_init(k[3], H, E)
    wout_re, bout_re = linear_init(k[4], E, H)
    wout_im, bout_im = linear_init(k[5], E, H)
    return dict(params_log=params_log,
                win_re=win_re, win_im=win_im, bin_re=bin_re, bin_im=bin_im,
                wout_re=wout_re, wout_im=wout_im, bout_re=bout_re,
                bout_im=bout_im,
                ln_w=jnp.ones((E,), jnp.float32), ln_b=jnp.zeros((E,), jnp.float32))


def lru_reference_numpy(x, mask, params):
    """Pure numpy mirror of the PyTorch forward (eval mode) for verification."""
    x = np.asarray(x, np.float32)
    mask = np.asarray(mask, np.float32)
    B, L, E = x.shape
    H = 2 * E
    p = {kk: np.asarray(vv) for kk, vv in params.items()}
    nu, theta, gamma = np.exp(p['params_log'])
    lamb = np.exp(-nu + 1j * theta).astype(np.complex64)[None, :]        # (1, H)
    win = (p['win_re'] + 1j * p['win_im']).astype(np.complex64)
    bin_ = (p['bin_re'] + 1j * p['bin_im']).astype(np.complex64)
    wout = (p['wout_re'] + 1j * p['wout_im']).astype(np.complex64)
    bout = (p['bout_re'] + 1j * p['bout_im']).astype(np.complex64)
    h = (x.astype(np.complex64) @ win.T + bin_) * gamma
    log2_L = int(math.ceil(math.log2(L)))
    D = H
    for i in range(1, log2_L + 1):
        l = 2 ** i
        h = h.reshape(B * L // l, l, D)
        m = mask.reshape(B * L // l, l)
        h1, h2 = h[:, :l // 2], h[:, l // 2:]
        if i > 1:
            lamb = np.concatenate([lamb, lamb * lamb[-1]], axis=0)
        h2 = h2 + lamb * h1[:, -1:] * m[:, l // 2 - 1:l // 2, None]
        h = np.concatenate([h1, h2], axis=1)
    h = h.reshape(B, L, D)
    y = np.real(h @ wout.T + bout) + x
    mean = y.mean(-1, keepdims=True)
    var = ((y - mean) ** 2).mean(-1, keepdims=True)
    return (y - mean) / np.sqrt(var + 1e-5) * p['ln_w'] + p['ln_b']


if __name__ == "__main__":
    key = jax.random.PRNGKey(0)

    # --- Config 1: exercises the l<=8 (in-tile) scan levels + batch grid ----
    d_model, B, L = 4, 2, 8
    kp, kx, km, key = jax.random.split(key, 4)
    params = init_params(kp, d_model)
    x = jax.random.normal(kx, (B, L, d_model), dtype=jnp.float32)
    mask = (jax.random.uniform(km, (B, L)) > 0.2).astype(jnp.float32)
    ref = lru_reference_numpy(x, mask, params)

    out32, now = lru_forward(x, mask, params, matmul_dtype=jnp.float32)
    out32 = jax.block_until_ready(out32)
    np.testing.assert_allclose(np.asarray(out32), ref, rtol=2e-3, atol=2e-3)
    assert now is None

    out16, _ = lru_forward(x, mask, params)        # default bf16 MXU path
    out16 = jax.block_until_ready(out16)
    # bf16 weights/activations at d_model=4 leave a few percent of
    # quantization noise; the f32 run above checks the algorithm tightly.
    np.testing.assert_allclose(np.asarray(out16), ref, rtol=7e-2, atol=7e-2)

    # --- Config 2: exercises the l>=16 (half-block) levels + grid steps -----
    d_model, B, L = 8, 4, 32
    kp, kx, km, key = jax.random.split(key, 4)
    params = init_params(kp, d_model)
    x = jax.random.normal(kx, (B, L, d_model), dtype=jnp.float32)
    mask = (jax.random.uniform(km, (B, L)) > 0.3).astype(jnp.float32)
    ref = lru_reference_numpy(x, mask, params)

    out32b, _ = lru_forward(x, mask, params, matmul_dtype=jnp.float32)
    out32b = jax.block_until_ready(out32b)
    np.testing.assert_allclose(np.asarray(out32b), ref, rtol=2e-3, atol=2e-3)

    # Same config through the fori_loop (non-unrolled) big-level path.
    out32c, _ = lru_forward(x, mask, params, matmul_dtype=jnp.float32,
                            max_block_unroll=1)
    out32c = jax.block_until_ready(out32c)
    np.testing.assert_allclose(np.asarray(out32c), ref, rtol=2e-3, atol=2e-3)

    print("KERNEL_OK")
</pallas_src>

<mosaic_0001>
module attributes {stable_mosaic.version = 11 : i64} {
  func.func @_lru_kernel(%arg0: i32, %arg1: memref<8x128xf32, #tpu.memory_space<vmem>>, %arg2: memref<1x8x1xf32, #tpu.memory_space<vmem>>, %arg3: memref<128x256xf32, #tpu.memory_space<vmem>>, %arg4: memref<1x256xf32, #tpu.memory_space<vmem>>, %arg5: memref<4x128xf32, #tpu.memory_space<vmem>>, %arg6: memref<4x128xf32, #tpu.memory_space<vmem>>, %arg7: memref<128x128xf32, #tpu.memory_space<vmem>>, %arg8: memref<128x128xf32, #tpu.memory_space<vmem>>, %arg9: memref<1x128xf32, #tpu.memory_space<vmem>>, %arg10: memref<1x128xf32, #tpu.memory_space<vmem>>, %arg11: memref<1x128xf32, #tpu.memory_space<vmem>>, %arg12: memref<8x128xf32, #tpu.memory_space<vmem>>, %arg13: memref<1x8x128xf32, #tpu.memory_space<vmem>>, %arg14: memref<1x8x128xf32, #tpu.memory_space<vmem>>) attributes {dimension_semantics = [#tpu.dimension_semantics<parallel>], iteration_bounds = array<i64: 2>, scalar_prefetch = 0 : i64, scratch_operands = 2 : i64, tpu.core_type = #tpu.core_type<tc>, window_params = [{transform_indices = @transform_0, window_bounds = array<i64: 8, 128>}, {transform_indices = @transform_1, window_bounds = array<i64: 1, 8, 1>}, {pipeline_mode = #tpu.pipeline_mode<synchronous>, transform_indices = @transform_2, window_bounds = array<i64: 128, 256>}, {pipeline_mode = #tpu.pipeline_mode<synchronous>, transform_indices = @transform_3, window_bounds = array<i64: 1, 256>}, {pipeline_mode = #tpu.pipeline_mode<synchronous>, transform_indices = @transform_4, window_bounds = array<i64: 4, 128>}, {pipeline_mode = #tpu.pipeline_mode<synchronous>, transform_indices = @transform_5, window_bounds = array<i64: 4, 128>}, {pipeline_mode = #tpu.pipeline_mode<synchronous>, transform_indices = @transform_6, window_bounds = array<i64: 128, 128>}, {pipeline_mode = #tpu.pipeline_mode<synchronous>, transform_indices = @transform_7, window_bounds = array<i64: 128, 128>}, {pipeline_mode = #tpu.pipeline_mode<synchronous>, transform_indices = @transform_8, window_bounds = array<i64: 1, 128>}, {pipeline_mode = #tpu.pipeline_mode<synchronous>, transform_indices = @transform_9, window_bounds = array<i64: 1, 128>}, {pipeline_mode = #tpu.pipeline_mode<synchronous>, transform_indices = @transform_10, window_bounds = array<i64: 1, 128>}, {transform_indices = @transform_11, window_bounds = array<i64: 8, 128>}]} {
    %c0 = arith.constant 0 : index
    %c0_0 = arith.constant 0 : index
    %0 = vector.load %arg1[%c0, %c0_0] : memref<8x128xf32, #tpu.memory_space<vmem>>, vector<8x128xf32>
    %c0_1 = arith.constant 0 : index
    %c0_2 = arith.constant 0 : index
    %1 = vector.load %arg3[%c0_1, %c0_2] : memref<128x256xf32, #tpu.memory_space<vmem>>, vector<128x256xf32>
    %cst = arith.constant dense<0.000000e+00> : vector<8x256xf32>
    %2 = tpu.matmul %0, %1, %cst {dimension_numbers = #tpu.dot_dimension_numbers<[1], [0], [0], [1], [0, 0, 1, 1], [], []>} : vector<8x128xf32>, vector<128x256xf32>, vector<8x256xf32> -> vector<8x256xf32>
    %c0_3 = arith.constant 0 : index
    %c0_4 = arith.constant 0 : index
    %3 = vector.load %arg4[%c0_3, %c0_4] : memref<1x256xf32, #tpu.memory_space<vmem>>, vector<1x256xf32>
    %4 = vector.broadcast %3 : vector<1x256xf32> to vector<8x256xf32>
    %5 = arith.addf %2, %4 : vector<8x256xf32>
    %6 = vector.extract_strided_slice %5 {offsets = [0, 0], sizes = [8, 128], strides = [1, 1]} : vector<8x256xf32> to vector<8x128xf32>
    %7 = vector.shape_cast %6 : vector<8x128xf32> to vector<1x8x128xf32>
    %c0_5 = arith.constant 0 : index
    %c0_6 = arith.constant 0 : index
    %c0_7 = arith.constant 0 : index
    %8 = vector.load %arg13[%c0_5, %c0_6, %c0_7] : memref<1x8x128xf32, #tpu.memory_space<vmem>>, vector<1x8x128xf32>
    tpu.vector_store %arg13[%c0_5, %c0_6, %c0_7], %7 {strides = array<i32>} : memref<1x8x128xf32, #tpu.memory_space<vmem>>, vector<1x8x128xf32>,
    %9 = vector.extract_strided_slice %5 {offsets = [0, 128], sizes = [8, 128], strides = [1, 1]} : vector<8x256xf32> to vector<8x128xf32>
    %10 = vector.shape_cast %9 : vector<8x128xf32> to vector<1x8x128xf32>
    %c0_8 = arith.constant 0 : index
    %c0_9 = arith.constant 0 : index
    %c0_10 = arith.constant 0 : index
    %11 = vector.load %arg14[%c0_8, %c0_9, %c0_10] : memref<1x8x128xf32, #tpu.memory_space<vmem>>, vector<1x8x128xf32>
    tpu.vector_store %arg14[%c0_8, %c0_9, %c0_10], %10 {strides = array<i32>} : memref<1x8x128xf32, #tpu.memory_space<vmem>>, vector<1x8x128xf32>,
    %c0_11 = arith.constant 0 : index
    %c0_12 = arith.constant 0 : index
    %12 = vector.load %arg5[%c0_11, %c0_12] : memref<4x128xf32, #tpu.memory_space<vmem>>, vector<1x128xf32>
    %c0_13 = arith.constant 0 : index
    %c0_14 = arith.constant 0 : index
    %13 = vector.load %arg6[%c0_13, %c0_14] : memref<4x128xf32, #tpu.memory_space<vmem>>, vector<1x128xf32>
    %c0_15 = arith.constant 0 : index
    %c0_16 = arith.constant 0 : index
    %c0_17 = arith.constant 0 : index
    %14 = vector.load %arg2[%c0_15, %c0_16, %c0_17] : memref<1x8x1xf32, #tpu.memory_space<vmem>>, vector<1x1x1xf32>
    %c0_18 = arith.constant 0 : index
    %c0_19 = arith.constant 0 : index
    %c0_20 = arith.constant 0 : index
    %15 = vector.load %arg13[%c0_18, %c0_19, %c0_20] : memref<1x8x128xf32, #tpu.memory_space<vmem>>, vector<1x1x128xf32>
    %16 = vector.broadcast %14 : vector<1x1x1xf32> to vector<1x1x128xf32>
    %17 = arith.mulf %15, %16 : vector<1x1x128xf32>
    %c0_21 = arith.constant 0 : index
    %c0_22 = arith.constant 0 : index
    %c0_23 = arith.constant 0 : index
    %18 = vector.load %arg14[%c0_21, %c0_22, %c0_23] : memref<1x8x128xf32, #tpu.memory_space<vmem>>, vector<1x1x128xf32>
    %19 = vector.broadcast %14 : vector<1x1x1xf32> to vector<1x1x128xf32>
    %20 = arith.mulf %18, %19 : vector<1x1x128xf32>
    %21 = vector.shape_cast %12 : vector<1x128xf32> to vector<1x1x128xf32>
    %22 = arith.mulf %21, %17 : vector<1x1x128xf32>
    %23 = vector.shape_cast %13 : vector<1x128xf32> to vector<1x1x128xf32>
    %24 = arith.mulf %23, %20 : vector<1x1x128xf32>
    %25 = arith.subf %22, %24 : vector<1x1x128xf32>
    %26 = vector.shape_cast %12 : vector<1x128xf32> to vector<1x1x128xf32>
    %27 = arith.mulf %26, %20 : vector<1x1x128xf32>
    %28 = vector.shape_cast %13 : vector<1x128xf32> to vector<1x1x128xf32>
    %29 = arith.mulf %28, %17 : vector<1x1x128xf32>
    %30 = arith.addf %27, %29 : vector<1x1x128xf32>
    %c0_24 = arith.constant 0 : index
    %c1 = arith.constant 1 : index
    %c0_25 = arith.constant 0 : index
    %31 = vector.load %arg13[%c0_24, %c1, %c0_25] : memref<1x8x128xf32, #tpu.memory_space<vmem>>, vector<1x1x128xf32>
    %32 = arith.addf %31, %25 : vector<1x1x128xf32>
    %c0_26 = arith.constant 0 : index
    %c1_27 = arith.constant 1 : index
    %c0_28 = arith.constant 0 : index
    %33 = vector.load %arg13[%c0_26, %c1_27, %c0_28] : memref<1x8x128xf32, #tpu.memory_space<vmem>>, vector<1x1x128xf32>
    tpu.vector_store %arg13[%c0_26, %c1_27, %c0_28], %32 {strides = array<i32>} : memref<1x8x128xf32, #tpu.memory_space<vmem>>, vector<1x1x128xf32>,
    %c0_29 = arith.constant 0 : index
    %c1_30 = arith.constant 1 : index
    %c0_31 = arith.constant 0 : index
    %34 = vector.load %arg14[%c0_29, %c1_30, %c0_31] : memref<1x8x128xf32, #tpu.memory_space<vmem>>, vector<1x1x128xf32>
    %35 = arith.addf %34, %30 : vector<1x1x128xf32>
    %c0_32 = arith.constant 0 : index
    %c1_33 = arith.constant 1 : index
    %c0_34 = arith.constant 0 : index
    %36 = vector.load %arg14[%c0_32, %c1_33, %c0_34] : memref<1x8x128xf32, #tpu.memory_space<vmem>>, vector<1x1x128xf32>
    tpu.vector_store %arg14[%c0_32, %c1_33, %c0_34], %35 {strides = array<i32>} : memref<1x8x128xf32, #tpu.memory_space<vmem>>, vector<1x1x128xf32>,
    %c0_35 = arith.constant 0 : index
    %c2 = arith.constant 2 : index
    %c0_36 = arith.constant 0 : index
    %37 = vector.load %arg2[%c0_35, %c2, %c0_36] : memref<1x8x1xf32, #tpu.memory_space<vmem>>, vector<1x1x1xf32>
    %c0_37 = arith.constant 0 : index
    %c2_38 = arith.constant 2 : index
    %c0_39 = arith.constant 0 : index
    %38 = vector.load %arg13[%c0_37, %c2_38, %c0_39] : memref<1x8x128xf32, #tpu.memory_space<vmem>>, vector<1x1x128xf32>
    %39 = vector.broadcast %37 : vector<1x1x1xf32> to vector<1x1x128xf32>
    %40 = arith.mulf %38, %39 : vector<1x1x128xf32>
    %c0_40 = arith.constant 0 : index
    %c2_41 = arith.constant 2 : index
    %c0_42 = arith.constant 0 : index
    %41 = vector.load %arg14[%c0_40, %c2_41, %c0_42] : memref<1x8x128xf32, #tpu.memory_space<vmem>>, vector<1x1x128xf32>
    %42 = vector.broadcast %37 : vector<1x1x1xf32> to vector<1x1x128xf32>
    %43 = arith.mulf %41, %42 : vector<1x1x128xf32>
    %44 = vector.shape_cast %12 : vector<1x128xf32> to vector<1x1x128xf32>
    %45 = arith.mulf %44, %40 : vector<1x1x128xf32>
    %46 = vector.shape_cast %13 : vector<1x128xf32> to vector<1x1x128xf32>
    %47 = arith.mulf %46, %43 : vector<1x1x128xf32>
    %48 = arith.subf %45, %47 : vector<1x1x128xf32>
    %49 = vector.shape_cast %12 : vector<1x128xf32> to vector<1x1x128xf32>
    %50 = arith.mulf %49, %43 : vector<1x1x128xf32>
    %51 = vector.shape_cast %13 : vector<1x128xf32> to vector<1x1x128xf32>
    %52 = arith.mulf %51, %40 : vector<1x1x128xf32>
    %53 = arith.addf %50, %52 : vector<1x1x128xf32>
    %c0_43 = arith.constant 0 : index
    %c3 = arith.constant 3 : index
    %c0_44 = arith.constant 0 : index
    %54 = vector.load %arg13[%c0_43, %c3, %c0_44] : memref<1x8x128xf32, #tpu.memory_space<vmem>>, vector<1x1x128xf32>
    %55 = arith.addf %54, %48 : vector<1x1x128xf32>
    %c0_45 = arith.constant 0 : index
    %c3_46 = arith.constant 3 : index
    %c0_47 = arith.constant 0 : index
    %56 = vector.load %arg13[%c0_45, %c3_46, %c0_47] : memref<1x8x128xf32, #tpu.memory_space<vmem>>, vector<1x1x128xf32>
    tpu.vector_store %arg13[%c0_45, %c3_46, %c0_47], %55 {strides = array<i32>} : memref<1x8x128xf32, #tpu.memory_space<vmem>>, vector<1x1x128xf32>,
    %c0_48 = arith.constant 0 : index
    %c3_49 = arith.constant 3 : index
    %c0_50 = arith.constant 0 : index
    %57 = vector.load %arg14[%c0_48, %c3_49, %c0_50] : memref<1x8x128xf32, #tpu.memory_space<vmem>>, vector<1x1x128xf32>
    %58 = arith.addf %57, %53 : vector<1x1x128xf32>
    %c0_51 = arith.constant 0 : index
    %c3_52 = arith.constant 3 : index
    %c0_53 = arith.constant 0 : index
    %59 = vector.load %arg14[%c0_51, %c3_52, %c0_53] : memref<1x8x128xf32, #tpu.memory_space<vmem>>, vector<1x1x128xf32>
    tpu.vector_store %arg14[%c0_51, %c3_52, %c0_53], %58 {strides = array<i32>} : memref<1x8x128xf32, #tpu.memory_space<vmem>>, vector<1x1x128xf32>,
    %c0_54 = arith.constant 0 : index
    %c4 = arith.constant 4 : index
    %c0_55 = arith.constant 0 : index
    %60 = vector.load %arg2[%c0_54, %c4, %c0_55] : memref<1x8x1xf32, #tpu.memory_space<vmem>>, vector<1x1x1xf32>
    %c0_56 = arith.constant 0 : index
    %c4_57 = arith.constant 4 : index
    %c0_58 = arith.constant 0 : index
    %61 = vector.load %arg13[%c0_56, %c4_57, %c0_58] : memref<1x8x128xf32, #tpu.memory_space<vmem>>, vector<1x1x128xf32>
    %62 = vector.broadcast %60 : vector<1x1x1xf32> to vector<1x1x128xf32>
    %63 = arith.mulf %61, %62 : vector<1x1x128xf32>
    %c0_59 = arith.constant 0 : index
    %c4_60 = arith.constant 4 : index
    %c0_61 = arith.constant 0 : index
    %64 = vector.load %arg14[%c0_59, %c4_60, %c0_61] : memref<1x8x128xf32, #tpu.memory_space<vmem>>, vector<1x1x128xf32>
    %65 = vector.broadcast %60 : vector<1x1x1xf32> to vector<1x1x128xf32>
    %66 = arith.mulf %64, %65 : vector<1x1x128xf32>
    %67 = vector.shape_cast %12 : vector<1x128xf32> to vector<1x1x128xf32>
    %68 = arith.mulf %67, %63 : vector<1x1x128xf32>
    %69 = vector.shape_cast %13 : vector<1x128xf32> to vector<1x1x128xf32>
    %70 = arith.mulf %69, %66 : vector<1x1x128xf32>
    %71 = arith.subf %68, %70 : vector<1x1x128xf32>
    %72 = vector.shape_cast %12 : vector<1x128xf32> to vector<1x1x128xf32>
    %73 = arith.mulf %72, %66 : vector<1x1x128xf32>
    %74 = vector.shape_cast %13 : vector<1x128xf32> to vector<1x1x128xf32>
    %75 = arith.mulf %74, %63 : vector<1x1x128xf32>
    %76 = arith.addf %73, %75 : vector<1x1x128xf32>
    %c0_62 = arith.constant 0 : index
    %c5 = arith.constant 5 : index
    %c0_63 = arith.constant 0 : index
    %77 = vector.load %arg13[%c0_62, %c5, %c0_63] : memref<1x8x128xf32, #tpu.memory_space<vmem>>, vector<1x1x128xf32>
    %78 = arith.addf %77, %71 : vector<1x1x128xf32>
    %c0_64 = arith.constant 0 : index
    %c5_65 = arith.constant 5 : index
    %c0_66 = arith.constant 0 : index
    %79 = vector.load %arg13[%c0_64, %c5_65, %c0_66] : memref<1x8x128xf32, #tpu.memory_space<vmem>>, vector<1x1x128xf32>
    tpu.vector_store %arg13[%c0_64, %c5_65, %c0_66], %78 {strides = array<i32>} : memref<1x8x128xf32, #tpu.memory_space<vmem>>, vector<1x1x128xf32>,
    %c0_67 = arith.constant 0 : index
    %c5_68 = arith.constant 5 : index
    %c0_69 = arith.constant 0 : index
    %80 = vector.load %arg14[%c0_67, %c5_68, %c0_69] : memref<1x8x128xf32, #tpu.memory_space<vmem>>, vector<1x1x128xf32>
    %81 = arith.addf %80, %76 : vector<1x1x128xf32>
    %c0_70 = arith.constant 0 : index
    %c5_71 = arith.constant 5 : index
    %c0_72 = arith.constant 0 : index
    %82 = vector.load %arg14[%c0_70, %c5_71, %c0_72] : memref<1x8x128xf32, #tpu.memory_space<vmem>>, vector<1x1x128xf32>
    tpu.vector_store %arg14[%c0_70, %c5_71, %c0_72], %81 {strides = array<i32>} : memref<1x8x128xf32, #tpu.memory_space<vmem>>, vector<1x1x128xf32>,
    %c0_73 = arith.constant 0 : index
    %c6 = arith.constant 6 : index
    %c0_74 = arith.constant 0 : index
    %83 = vector.load %arg2[%c0_73, %c6, %c0_74] : memref<1x8x1xf32, #tpu.memory_space<vmem>>, vector<1x1x1xf32>
    %c0_75 = arith.constant 0 : index
    %c6_76 = arith.constant 6 : index
    %c0_77 = arith.constant 0 : index
    %84 = vector.load %arg13[%c0_75, %c6_76, %c0_77] : memref<1x8x128xf32, #tpu.memory_space<vmem>>, vector<1x1x128xf32>
    %85 = vector.broadcast %83 : vector<1x1x1xf32> to vector<1x1x128xf32>
    %86 = arith.mulf %84, %85 : vector<1x1x128xf32>
    %c0_78 = arith.constant 0 : index
    %c6_79 = arith.constant 6 : index
    %c0_80 = arith.constant 0 : index
    %87 = vector.load %arg14[%c0_78, %c6_79, %c0_80] : memref<1x8x128xf32, #tpu.memory_space<vmem>>, vector<1x1x128xf32>
    %88 = vector.broadcast %83 : vector<1x1x1xf32> to vector<1x1x128xf32>
    %89 = arith.mulf %87, %88 : vector<1x1x128xf32>
    %90 = vector.shape_cast %12 : vector<1x128xf32> to vector<1x1x128xf32>
    %91 = arith.mulf %90, %86 : vector<1x1x128xf32>
    %92 = vector.shape_cast %13 : vector<1x128xf32> to vector<1x1x128xf32>
    %93 = arith.mulf %92, %89 : vector<1x1x128xf32>
    %94 = arith.subf %91, %93 : vector<1x1x128xf32>
    %95 = vector.shape_cast %12 : vector<1x128xf32> to vector<1x1x128xf32>
    %96 = arith.mulf %95, %89 : vector<1x1x128xf32>
    %97 = vector.shape_cast %13 : vector<1x128xf32> to vector<1x1x128xf32>
    %98 = arith.mulf %97, %86 : vector<1x1x128xf32>
    %99 = arith.addf %96, %98 : vector<1x1x128xf32>
    %c0_81 = arith.constant 0 : index
    %c7 = arith.constant 7 : index
    %c0_82 = arith.constant 0 : index
    %100 = vector.load %arg13[%c0_81, %c7, %c0_82] : memref<1x8x128xf32, #tpu.memory_space<vmem>>, vector<1x1x128xf32>
    %101 = arith.addf %100, %94 : vector<1x1x128xf32>
    %c0_83 = arith.constant 0 : index
    %c7_84 = arith.constant 7 : index
    %c0_85 = arith.constant 0 : index
    %102 = vector.load %arg13[%c0_83, %c7_84, %c0_85] : memref<1x8x128xf32, #tpu.memory_space<vmem>>, vector<1x1x128xf32>
    tpu.vector_store %arg13[%c0_83, %c7_84, %c0_85], %101 {strides = array<i32>} : memref<1x8x128xf32, #tpu.memory_space<vmem>>, vector<1x1x128xf32>,
    %c0_86 = arith.constant 0 : index
    %c7_87 = arith.constant 7 : index
    %c0_88 = arith.constant 0 : index
    %103 = vector.load %arg14[%c0_86, %c7_87, %c0_88] : memref<1x8x128xf32, #tpu.memory_space<vmem>>, vector<1x1x128xf32>
    %104 = arith.addf %103, %99 : vector<1x1x128xf32>
    %c0_89 = arith.constant 0 : index
    %c7_90 = arith.constant 7 : index
    %c0_91 = arith.constant 0 : index
    %105 = vector.load %arg14[%c0_89, %c7_90, %c0_91] : memref<1x8x128xf32, #tpu.memory_space<vmem>>, vector<1x1x128xf32>
    tpu.vector_store %arg14[%c0_89, %c7_90, %c0_91], %104 {strides = array<i32>} : memref<1x8x128xf32, #tpu.memory_space<vmem>>, vector<1x1x128xf32>,
    %c0_92 = arith.constant 0 : index
    %c0_93 = arith.constant 0 : index
    %106 = vector.load %arg5[%c0_92, %c0_93] : memref<4x128xf32, #tpu.memory_space<vmem>>, vector<2x128xf32>
    %c0_94 = arith.constant 0 : index
    %c0_95 = arith.constant 0 : index
    %107 = vector.load %arg6[%c0_94, %c0_95] : memref<4x128xf32, #tpu.memory_space<vmem>>, vector<2x128xf32>
    %c0_96 = arith.constant 0 : index
    %c1_97 = arith.constant 1 : index
    %c0_98 = arith.constant 0 : index
    %108 = vector.load %arg2[%c0_96, %c1_97, %c0_98] : memref<1x8x1xf32, #tpu.memory_space<vmem>>, vector<1x1x1xf32>
    %c0_99 = arith.constant 0 : index
    %c1_100 = arith.constant 1 : index
    %c0_101 = arith.constant 0 : index
    %109 = vector.load %arg13[%c0_99, %c1_100, %c0_101] : memref<1x8x128xf32, #tpu.memory_space<vmem>>, vector<1x1x128xf32>
    %110 = vector.broadcast %108 : vector<1x1x1xf32> to vector<1x1x128xf32>
    %111 = arith.mulf %109, %110 : vector<1x1x128xf32>
    %c0_102 = arith.constant 0 : index
    %c1_103 = arith.constant 1 : index
    %c0_104 = arith.constant 0 : index
    %112 = vector.load %arg14[%c0_102, %c1_103, %c0_104] : memref<1x8x128xf32, #tpu.memory_space<vmem>>, vector<1x1x128xf32>
    %113 = vector.broadcast %108 : vector<1x1x1xf32> to vector<1x1x128xf32>
    %114 = arith.mulf %112, %113 : vector<1x1x128xf32>
    %115 = vector.shape_cast %106 : vector<2x128xf32> to vector<1x2x128xf32>
    %116 = vector.broadcast %111 : vector<1x1x128xf32> to vector<1x2x128xf32>
    %117 = arith.mulf %115, %116 : vector<1x2x128xf32>
    %118 = vector.shape_cast %107 : vector<2x128xf32> to vector<1x2x128xf32>
    %119 = vector.broadcast %114 : vector<1x1x128xf32> to vector<1x2x128xf32>
    %120 = arith.mulf %118, %119 : vector<1x2x128xf32>
    %121 = arith.subf %117, %120 : vector<1x2x128xf32>
    %122 = vector.shape_cast %106 : vector<2x128xf32> to vector<1x2x128xf32>
    %123 = vector.broadcast %114 : vector<1x1x128xf32> to vector<1x2x128xf32>
    %124 = arith.mulf %122, %123 : vector<1x2x128xf32>
    %125 = vector.shape_cast %107 : vector<2x128xf32> to vector<1x2x128xf32>
    %126 = vector.broadcast %111 : vector<1x1x128xf32> to vector<1x2x128xf32>
    %127 = arith.mulf %125, %126 : vector<1x2x128xf32>
    %128 = arith.addf %124, %127 : vector<1x2x128xf32>
    %c0_105 = arith.constant 0 : index
    %c2_106 = arith.constant 2 : index
    %c0_107 = arith.constant 0 : index
    %129 = vector.load %arg13[%c0_105, %c2_106, %c0_107] : memref<1x8x128xf32, #tpu.memory_space<vmem>>, vector<1x2x128xf32>
    %130 = arith.addf %129, %121 : vector<1x2x128xf32>
    %c0_108 = arith.constant 0 : index
    %c2_109 = arith.constant 2 : index
    %c0_110 = arith.constant 0 : index
    %131 = vector.load %arg13[%c0_108, %c2_109, %c0_110] : memref<1x8x128xf32, #tpu.memory_space<vmem>>, vector<1x2x128xf32>
    tpu.vector_store %arg13[%c0_108, %c2_109, %c0_110], %130 {strides = array<i32>} : memref<1x8x128xf32, #tpu.memory_space<vmem>>, vector<1x2x128xf32>,
    %c0_111 = arith.constant 0 : index
    %c2_112 = arith.constant 2 : index
    %c0_113 = arith.constant 0 : index
    %132 = vector.load %arg14[%c0_111, %c2_112, %c0_113] : memref<1x8x128xf32, #tpu.memory_space<vmem>>, vector<1x2x128xf32>
    %133 = arith.addf %132, %128 : vector<1x2x128xf32>
    %c0_114 = arith.constant 0 : index
    %c2_115 = arith.constant 2 : index
    %c0_116 = arith.constant 0 : index
    %134 = vector.load %arg14[%c0_114, %c2_115, %c0_116] : memref<1x8x128xf32, #tpu.memory_space<vmem>>, vector<1x2x128xf32>
    tpu.vector_store %arg14[%c0_114, %c2_115, %c0_116], %133 {strides = array<i32>} : memref<1x8x128xf32, #tpu.memory_space<vmem>>, vector<1x2x128xf32>,
    %c0_117 = arith.constant 0 : index
    %c5_118 = arith.constant 5 : index
    %c0_119 = arith.constant 0 : index
    %135 = vector.load %arg2[%c0_117, %c5_118, %c0_119] : memref<1x8x1xf32, #tpu.memory_space<vmem>>, vector<1x1x1xf32>
    %c0_120 = arith.constant 0 : index
    %c5_121 = arith.constant 5 : index
    %c0_122 = arith.constant 0 : index
    %136 = vector.load %arg13[%c0_120, %c5_121, %c0_122] : memref<1x8x128xf32, #tpu.memory_space<vmem>>, vector<1x1x128xf32>
    %137 = vector.broadcast %135 : vector<1x1x1xf32> to vector<1x1x128xf32>
    %138 = arith.mulf %136, %137 : vector<1x1x128xf32>
    %c0_123 = arith.constant 0 : index
    %c5_124 = arith.constant 5 : index
    %c0_125 = arith.constant 0 : index
    %139 = vector.load %arg14[%c0_123, %c5_124, %c0_125] : memref<1x8x128xf32, #tpu.memory_space<vmem>>, vector<1x1x128xf32>
    %140 = vector.broadcast %135 : vector<1x1x1xf32> to vector<1x1x128xf32>
    %141 = arith.mulf %139, %140 : vector<1x1x128xf32>
    %142 = vector.shape_cast %106 : vector<2x128xf32> to vector<1x2x128xf32>
    %143 = vector.broadcast %138 : vector<1x1x128xf32> to vector<1x2x128xf32>
    %144 = arith.mulf %142, %143 : vector<1x2x128xf32>
    %145 = vector.shape_cast %107 : vector<2x128xf32> to vector<1x2x128xf32>
    %146 = vector.broadcast %141 : vector<1x1x128xf32> to vector<1x2x128xf32>
    %147 = arith.mulf %145, %146 : vector<1x2x128xf32>
    %148 = arith.subf %144, %147 : vector<1x2x128xf32>
    %149 = vector.shape_cast %106 : vector<2x128xf32> to vector<1x2x128xf32>
    %150 = vector.broadcast %141 : vector<1x1x128xf32> to vector<1x2x128xf32>
    %151 = arith.mulf %149, %150 : vector<1x2x128xf32>
    %152 = vector.shape_cast %107 : vector<2x128xf32> to vector<1x2x128xf32>
    %153 = vector.broadcast %138 : vector<1x1x128xf32> to vector<1x2x128xf32>
    %154 = arith.mulf %152, %153 : vector<1x2x128xf32>
    %155 = arith.addf %151, %154 : vector<1x2x128xf32>
    %c0_126 = arith.constant 0 : index
    %c6_127 = arith.constant 6 : index
    %c0_128 = arith.constant 0 : index
    %156 = vector.load %arg13[%c0_126, %c6_127, %c0_128] : memref<1x8x128xf32, #tpu.memory_space<vmem>>, vector<1x2x128xf32>
    %157 = arith.addf %156, %148 : vector<1x2x128xf32>
    %c0_129 = arith.constant 0 : index
    %c6_130 = arith.constant 6 : index
    %c0_131 = arith.constant 0 : index
    %158 = vector.load %arg13[%c0_129, %c6_130, %c0_131] : memref<1x8x128xf32, #tpu.memory_space<vmem>>, vector<1x2x128xf32>
    tpu.vector_store %arg13[%c0_129, %c6_130, %c0_131], %157 {strides = array<i32>} : memref<1x8x128xf32, #tpu.memory_space<vmem>>, vector<1x2x128xf32>,
    %c0_132 = arith.constant 0 : index
    %c6_133 = arith.constant 6 : index
    %c0_134 = arith.constant 0 : index
    %159 = vector.load %arg14[%c0_132, %c6_133, %c0_134] : memref<1x8x128xf32, #tpu.memory_space<vmem>>, vector<1x2x128xf32>
    %160 = arith.addf %159, %155 : vector<1x2x128xf32>
    %c0_135 = arith.constant 0 : index
    %c6_136 = arith.constant 6 : index
    %c0_137 = arith.constant 0 : index
    %161 = vector.load %arg14[%c0_135, %c6_136, %c0_137] : memref<1x8x128xf32, #tpu.memory_space<vmem>>, vector<1x2x128xf32>
    tpu.vector_store %arg14[%c0_135, %c6_136, %c0_137], %160 {strides = array<i32>} : memref<1x8x128xf32, #tpu.memory_space<vmem>>, vector<1x2x128xf32>,
    %c0_138 = arith.constant 0 : index
    %c0_139 = arith.constant 0 : index
    %162 = vector.load %arg5[%c0_138, %c0_139] : memref<4x128xf32, #tpu.memory_space<vmem>>, vector<4x128xf32>
    %c0_140 = arith.constant 0 : index
    %c0_141 = arith.constant 0 : index
    %163 = vector.load %arg6[%c0_140, %c0_141] : memref<4x128xf32, #tpu.memory_space<vmem>>, vector<4x128xf32>
    %c0_142 = arith.constant 0 : index
    %c3_143 = arith.constant 3 : index
    %c0_144 = arith.constant 0 : index
    %164 = vector.load %arg2[%c0_142, %c3_143, %c0_144] : memref<1x8x1xf32, #tpu.memory_space<vmem>>, vector<1x1x1xf32>
    %c0_145 = arith.constant 0 : index
    %c3_146 = arith.constant 3 : index
    %c0_147 = arith.constant 0 : index
    %165 = vector.load %arg13[%c0_145, %c3_146, %c0_147] : memref<1x8x128xf32, #tpu.memory_space<vmem>>, vector<1x1x128xf32>
    %166 = vector.broadcast %164 : vector<1x1x1xf32> to vector<1x1x128xf32>
    %167 = arith.mulf %165, %166 : vector<1x1x128xf32>
    %c0_148 = arith.constant 0 : index
    %c3_149 = arith.constant 3 : index
    %c0_150 = arith.constant 0 : index
    %168 = vector.load %arg14[%c0_148, %c3_149, %c0_150] : memref<1x8x128xf32, #tpu.memory_space<vmem>>, vector<1x1x128xf32>
    %169 = vector.broadcast %164 : vector<1x1x1xf32> to vector<1x1x128xf32>
    %170 = arith.mulf %168, %169 : vector<1x1x128xf32>
    %171 = vector.shape_cast %162 : vector<4x128xf32> to vector<1x4x128xf32>
    %172 = vector.broadcast %167 : vector<1x1x128xf32> to vector<1x4x128xf32>
    %173 = arith.mulf %171, %172 : vector<1x4x128xf32>
    %174 = vector.shape_cast %163 : vector<4x128xf32> to vector<1x4x128xf32>
    %175 = vector.broadcast %170 : vector<1x1x128xf32> to vector<1x4x128xf32>
    %176 = arith.mulf %174, %175 : vector<1x4x128xf32>
    %177 = arith.subf %173, %176 : vector<1x4x128xf32>
    %178 = vector.shape_cast %162 : vector<4x128xf32> to vector<1x4x128xf32>
    %179 = vector.broadcast %170 : vector<1x1x128xf32> to vector<1x4x128xf32>
    %180 = arith.mulf %178, %179 : vector<1x4x128xf32>
    %181 = vector.shape_cast %163 : vector<4x128xf32> to vector<1x4x128xf32>
    %182 = vector.broadcast %167 : vector<1x1x128xf32> to vector<1x4x128xf32>
    %183 = arith.mulf %181, %182 : vector<1x4x128xf32>
    %184 = arith.addf %180, %183 : vector<1x4x128xf32>
    %c0_151 = arith.constant 0 : index
    %c4_152 = arith.constant 4 : index
    %c0_153 = arith.constant 0 : index
    %185 = vector.load %arg13[%c0_151, %c4_152, %c0_153] : memref<1x8x128xf32, #tpu.memory_space<vmem>>, vector<1x4x128xf32>
    %186 = arith.addf %185, %177 : vector<1x4x128xf32>
    %c0_154 = arith.constant 0 : index
    %c4_155 = arith.constant 4 : index
    %c0_156 = arith.constant 0 : index
    %187 = vector.load %arg13[%c0_154, %c4_155, %c0_156] : memref<1x8x128xf32, #tpu.memory_space<vmem>>, vector<1x4x128xf32>
    tpu.vector_store %arg13[%c0_154, %c4_155, %c0_156], %186 {strides = array<i32>} : memref<1x8x128xf32, #tpu.memory_space<vmem>>, vector<1x4x128xf32>,
    %c0_157 = arith.constant 0 : index
    %c4_158 = arith.constant 4 : index
    %c0_159 = arith.constant 0 : index
    %188 = vector.load %arg14[%c0_157, %c4_158, %c0_159] : memref<1x8x128xf32, #tpu.memory_space<vmem>>, vector<1x4x128xf32>
    %189 = arith.addf %188, %184 : vector<1x4x128xf32>
    %c0_160 = arith.constant 0 : index
    %c4_161 = arith.constant 4 : index
    %c0_162 = arith.constant 0 : index
    %190 = vector.load %arg14[%c0_160, %c4_161, %c0_162] : memref<1x8x128xf32, #tpu.memory_space<vmem>>, vector<1x4x128xf32>
    tpu.vector_store %arg14[%c0_160, %c4_161, %c0_162], %189 {strides = array<i32>} : memref<1x8x128xf32, #tpu.memory_space<vmem>>, vector<1x4x128xf32>,
    %c0_163 = arith.constant 0 : index
    %c0_164 = arith.constant 0 : index
    %c0_165 = arith.constant 0 : index
    %191 = vector.load %arg13[%c0_163, %c0_164, %c0_165] : memref<1x8x128xf32, #tpu.memory_space<vmem>>, vector<1x8x128xf32>
    %192 = vector.shape_cast %191 : vector<1x8x128xf32> to vector<8x128xf32>
    %c0_166 = arith.constant 0 : index
    %c0_167 = arith.constant 0 : index
    %c0_168 = arith.constant 0 : index
    %193 = vector.load %arg14[%c0_166, %c0_167, %c0_168] : memref<1x8x128xf32, #tpu.memory_space<vmem>>, vector<1x8x128xf32>
    %194 = vector.shape_cast %193 : vector<1x8x128xf32> to vector<8x128xf32>
    %c0_169 = arith.constant 0 : index
    %c0_170 = arith.constant 0 : index
    %195 = vector.load %arg7[%c0_169, %c0_170] : memref<128x128xf32, #tpu.memory_space<vmem>>, vector<128x128xf32>
    %cst_171 = arith.constant dense<0.000000e+00> : vector<8x128xf32>
    %196 = tpu.matmul %192, %195, %cst_171 {dimension_numbers = #tpu.dot_dimension_numbers<[1], [0], [0], [1], [0, 0, 1, 1], [], []>} : vector<8x128xf32>, vector<128x128xf32>, vector<8x128xf32> -> vector<8x128xf32>
    %c0_172 = arith.constant 0 : index
    %c0_173 = arith.constant 0 : index
    %197 = vector.load %arg8[%c0_172, %c0_173] : memref<128x128xf32, #tpu.memory_space<vmem>>, vector<128x128xf32>
    %cst_174 = arith.constant dense<0.000000e+00> : vector<8x128xf32>
    %198 = tpu.matmul %194, %197, %cst_174 {dimension_numbers = #tpu.dot_dimension_numbers<[1], [0], [0], [1], [0, 0, 1, 1], [], []>} : vector<8x128xf32>, vector<128x128xf32>, vector<8x128xf32> -> vector<8x128xf32>
    %199 = arith.subf %196, %198 : vector<8x128xf32>
    %c0_175 = arith.constant 0 : index
    %c0_176 = arith.constant 0 : index
    %200 = vector.load %arg9[%c0_175, %c0_176] : memref<1x128xf32, #tpu.memory_space<vmem>>, vector<1x128xf32>
    %201 = vector.broadcast %200 : vector<1x128xf32> to vector<8x128xf32>
    %202 = arith.addf %199, %201 : vector<8x128xf32>
    %c0_177 = arith.constant 0 : index
    %c0_178 = arith.constant 0 : index
    %203 = vector.load %arg1[%c0_177, %c0_178] : memref<8x128xf32, #tpu.memory_space<vmem>>, vector<8x128xf32>
    %204 = arith.addf %202, %203 : vector<8x128xf32>
    %cst_179 = arith.constant dense<0.000000e+00> : vector<8xf32>
    %205 = vector.multi_reduction <add>, %204, %cst_179 [1] : vector<8x128xf32> to vector<8xf32>
    %206 = vector.shape_cast %205 : vector<8xf32> to vector<8x1xf32>
    %cst_180 = arith.constant 2.500000e-01 : f32
    %207 = vector.broadcast %cst_180 : f32 to vector<8x1xf32>
    %208 = arith.mulf %206, %207 : vector<8x1xf32>
    %209 = tpu.iota {dimensions = array<i32: 1>} : vector<1x128xi32>
    %210 = vector.broadcast %208 : vector<8x1xf32> to vector<8x128xf32>
    %211 = arith.subf %204, %210 : vector<8x128xf32>
    %c4_i32 = arith.constant 4 : i32
    %212 = vector.broadcast %c4_i32 : i32 to vector<1x128xi32>
    %213 = arith.cmpi slt, %209, %212 : vector<1x128xi32>
    %214 = arith.extui %213 : vector<1x128xi1> to vector<1x128xi32>
    %215 = arith.sitofp %214 : vector<1x128xi32> to vector<1x128xf32>
    %216 = vector.broadcast %215 : vector<1x128xf32> to vector<8x128xf32>
    %217 = arith.mulf %211, %216 : vector<8x128xf32>
    %218 = arith.mulf %217, %217 : vector<8x128xf32>
    %cst_181 = arith.constant dense<0.000000e+00> : vector<8xf32>
    %219 = vector.multi_reduction <add>, %218, %cst_181 [1] : vector<8x128xf32> to vector<8xf32>
    %220 = vector.shape_cast %219 : vector<8xf32> to vector<8x1xf32>
    %cst_182 = arith.constant 2.500000e-01 : f32
    %221 = vector.broadcast %cst_182 : f32 to vector<8x1xf32>
    %222 = arith.mulf %220, %221 : vector<8x1xf32>
    %cst_183 = arith.constant 9.99999974E-6 : f32
    %223 = vector.broadcast %cst_183 : f32 to vector<8x1xf32>
    %224 = arith.addf %222, %223 : vector<8x1xf32>
    %225 = math.rsqrt %224 : vector<8x1xf32>
    %226 = vector.broadcast %225 : vector<8x1xf32> to vector<8x128xf32>
    %227 = arith.mulf %217, %226 : vector<8x128xf32>
    %c0_184 = arith.constant 0 : index
    %c0_185 = arith.constant 0 : index
    %228 = vector.load %arg10[%c0_184, %c0_185] : memref<1x128xf32, #tpu.memory_space<vmem>>, vector<1x128xf32>
    %229 = vector.broadcast %228 : vector<1x128xf32> to vector<8x128xf32>
    %230 = arith.mulf %227, %229 : vector<8x128xf32>
    %c0_186 = arith.constant 0 : index
    %c0_187 = arith.constant 0 : index
    %231 = vector.load %arg11[%c0_186, %c0_187] : memref<1x128xf32, #tpu.memory_space<vmem>>, vector<1x128xf32>
    %232 = vector.broadcast %231 : vector<1x128xf32> to vector<8x128xf32>
    %233 = arith.addf %230, %232 : vector<8x128xf32>
    %c0_188 = arith.constant 0 : index
    %c0_189 = arith.constant 0 : index
    %234 = vector.load %arg12[%c0_188, %c0_189] : memref<8x128xf32, #tpu.memory_space<vmem>>, vector<8x128xf32>
    tpu.vector_store %arg12[%c0_188, %c0_189], %233 {strides = array<i32>} : memref<8x128xf32, #tpu.memory_space<vmem>>, vector<8x128xf32>,
    return
  }
  func.func @transform_0(%arg0: i32) -> (i32, i32) {
    %c0_i32 = arith.constant 0 : i32
    %c0_i32_0 = arith.constant 0 : i32
    return %arg0, %c0_i32 : i32, i32
  }
  func.func @transform_1(%arg0: i32) -> (i32, i32, i32) {
    %c0_i32 = arith.constant 0 : i32
    %c0_i32_0 = arith.constant 0 : i32
    %c0_i32_1 = arith.constant 0 : i32
    return %arg0, %c0_i32, %c0_i32_0 : i32, i32, i32
  }
  func.func @transform_2(%arg0: i32) -> (i32, i32) {
    %c0_i32 = arith.constant 0 : i32
    %c0_i32_0 = arith.constant 0 : i32
    %c0_i32_1 = arith.constant 0 : i32
    return %c0_i32, %c0_i32_0 : i32, i32
  }
  func.func @transform_3(%arg0: i32) -> (i32, i32) {
    %c0_i32 = arith.constant 0 : i32
    %c0_i32_0 = arith.constant 0 : i32
    %c0_i32_1 = arith.constant 0 : i32
    return %c0_i32, %c0_i32_0 : i32, i32
  }
  func.func @transform_4(%arg0: i32) -> (i32, i32) {
    %c0_i32 = arith.constant 0 : i32
    %c0_i32_0 = arith.constant 0 : i32
    %c0_i32_1 = arith.constant 0 : i32
    return %c0_i32, %c0_i32_0 : i32, i32
  }
  func.func @transform_5(%arg0: i32) -> (i32, i32) {
    %c0_i32 = arith.constant 0 : i32
    %c0_i32_0 = arith.constant 0 : i32
    %c0_i32_1 = arith.constant 0 : i32
    return %c0_i32, %c0_i32_0 : i32, i32
  }
  func.func @transform_6(%arg0: i32) -> (i32, i32) {
    %c0_i32 = arith.constant 0 : i32
    %c0_i32_0 = arith.constant 0 : i32
    %c0_i32_1 = arith.constant 0 : i32
    return %c0_i32, %c0_i32_0 : i32, i32
  }
  func.func @transform_7(%arg0: i32) -> (i32, i32) {
    %c0_i32 = arith.constant 0 : i32
    %c0_i32_0 = arith.constant 0 : i32
    %c0_i32_1 = arith.constant 0 : i32
    return %c0_i32, %c0_i32_0 : i32, i32
  }
  func.func @transform_8(%arg0: i32) -> (i32, i32) {
    %c0_i32 = arith.constant 0 : i32
    %c0_i32_0 = arith.constant 0 : i32
    %c0_i32_1 = arith.constant 0 : i32
    return %c0_i32, %c0_i32_0 : i32, i32
  }
  func.func @transform_9(%arg0: i32) -> (i32, i32) {
    %c0_i32 = arith.constant 0 : i32
    %c0_i32_0 = arith.constant 0 : i32
    %c0_i32_1 = arith.constant 0 : i32
    return %c0_i32, %c0_i32_0 : i32, i32
  }
  func.func @transform_10(%arg0: i32) -> (i32, i32) {
    %c0_i32 = arith.constant 0 : i32
    %c0_i32_0 = arith.constant 0 : i32
    %c0_i32_1 = arith.constant 0 : i32
    return %c0_i32, %c0_i32_0 : i32, i32
  }
  func.func @transform_11(%arg0: i32) -> (i32, i32) {
    %c0_i32 = arith.constant 0 : i32
    %c0_i32_0 = arith.constant 0 : i32
    return %arg0, %c0_i32 : i32, i32
  }
}

</mosaic_0001>

<llo_original>
// kernel: tpu_custom_call.1
$region0: #{tpu_custom_call.1}
  #allocation0 [shape = 'u32[]', space=smem, size = 0x4, offset = 0x4, fixed_abs, tag = 'smem constant byte address 0x4 - core index']
  #allocation1 [shape = 'u32[72,128]{1,0:T(1,128)}', space=vmem, size = 0x9000, scoped, tag = 'internal scratch']
  #allocation2 [shape = 'f32[1,8,128]{2,1,0:T(8,128)}', space=vmem, size = 0x1000, scoped, tag = 'scratch operand']
  #allocation3 [shape = 'f32[1,8,128]{2,1,0:T(8,128)}', space=vmem, size = 0x1000, scoped, tag = 'scratch operand']
  %s0 = inlined_call_operand.vmem [shape: f32[16,128], index: 0, kind: input, shape index: {}]
  %s1 = inlined_call_operand.vmem [shape: f32[2,8,1], index: 1, kind: input, shape index: {}]
  %s2 = inlined_call_operand.hbm [shape: f32[128,256], index: 2, kind: input, shape index: {}]
  %s3 = inlined_call_operand.hbm [shape: f32[1,256], index: 3, kind: input, shape index: {}]
  %s4 = inlined_call_operand.vmem [shape: f32[4,128], index: 4, kind: input, shape index: {}]
  %s5 = inlined_call_operand.hbm [shape: f32[4,128], index: 5, kind: input, shape index: {}]
  %s6 = inlined_call_operand.hbm [shape: f32[128,128], index: 6, kind: input, shape index: {}]
  %s7 = inlined_call_operand.hbm [shape: f32[128,128], index: 7, kind: input, shape index: {}]
  %s8 = inlined_call_operand.vmem [shape: f32[1,128], index: 8, kind: input, shape index: {}]
  %s9 = inlined_call_operand.vmem [shape: f32[1,128], index: 9, kind: input, shape index: {}]
  %s10 = inlined_call_operand.vmem [shape: f32[1,128], index: 10, kind: input, shape index: {}]
  %s11 = inlined_call_operand.hbm [shape: f32[16,128], index: 11, kind: output, shape index: {}]
  %s12 = sld [smem:[#allocation0]]
  $region97: #{tpu_custom_call.1} parent=0
    _
  %s14 = ssub.s32 1, %s12
  %s15 = scalar_select 0, %s14, %s12
  $region1: #{tpu_custom_call.1} parent=0
    #allocation4 [shape = 'u8[131072]{0}', space=vmem, size = 0x20000, scoped, tag = 'input window, operand 2, single buffered']
    #allocation5 [shape = 's32[2]{0}', space=sflag, size = 0x8, scoped, tag = 'scoped memory for tpu_custom_call.1']
    #allocation6 [shape = 's32[2]{0}', space=sflag, size = 0x8, scoped, tag = 'scoped memory for tpu_custom_call.1']
    #allocation7 [shape = 'u8[1024]{0}', space=vmem, size = 0x400, scoped, tag = 'input window, operand 3, single buffered']
    #allocation8 [shape = 's32[1]{0}', space=sflag, size = 0x4, scoped, tag = 'scoped memory for tpu_custom_call.1']
    #allocation9 [shape = 'u8[2048]{0}', space=vmem, size = 0x800, scoped, tag = 'input window, operand 5, single buffered']
    #allocation10 [shape = 'u8[65536]{0}', space=vmem, size = 0x10000, scoped, tag = 'input window, operand 6, single buffered']
    #allocation11 [shape = 's32[1]{0}', space=sflag, size = 0x4, scoped, tag = 'scoped memory for tpu_custom_call.1']
    #allocation12 [shape = 'u8[65536]{0}', space=vmem, size = 0x10000, scoped, tag = 'input window, operand 7, single buffered']
    #allocation13 [shape = 'u8[8192]{0}', space=vmem, size = 0x2000, scoped, tag = 'output window, operand 0']
    %16 = vsyncpa [#allocation5], 0
    %17 = vsyncpa [#allocation8], 0
    %18 = vsyncpa [#allocation11], 0
    %19 = vsyncpa [#allocation6], 0
    %s20 = scalar_lea.sflag [#allocation6], 1
    %21 = vsyncpa %s20, 0
    loop: start=0, step=1, limit=4
    $region2: #{tpu_custom_call.1} parent=1 // loop_pre_header
      _
    $region3: #{tpu_custom_call.1} parent=1 // loop_header
      %s23 = sphi 0, %s27
      %p24 = scmp.ge.s32.totalorder %s23, 4
      %s33 = sphi 0, %s35
      %s36 = sphi 0, %s33
      %s37 = sphi 0, %s36
      %s53 = sphi 0, %s37
      %s59 = sphi 0, %s61
      %s62 = sphi 0, %s59
      %s63 = sphi 0, %s62
      %s79 = sphi 0, %s63
      %s83 = sphi 0, %s83
      %s85 = sphi 0, %s83
      %s86 = sphi 0, %s85
      %s100 = sphi 0, %s86
      %s104 = sphi 0, %s104
      %s106 = sphi 0, %s104
      %s107 = sphi 0, %s106
      %s121 = sphi 0, %s107
      %s125 = sphi 0, %s125
      %s127 = sphi 0, %s125
      %s128 = sphi 0, %s127
      %s142 = sphi 0, %s128
      %s146 = sphi 0, %s146
      %s148 = sphi 0, %s146
      %s149 = sphi 0, %s148
      %s163 = sphi 0, %s149
      %s167 = sphi 0, %s167
      %s169 = sphi 0, %s167
      %s170 = sphi 0, %s169
      %s184 = sphi 0, %s170
      %s188 = sphi 0, %s188
      %s190 = sphi 0, %s188
      %s191 = sphi 0, %s190
      %s205 = sphi 0, %s191
      %s209 = sphi 0, %s209
      %s211 = sphi 0, %s209
      %s212 = sphi 0, %s211
      %s226 = sphi 0, %s212
      %s230 = sphi 0, %s230
      %s232 = sphi 0, %s230
      %s233 = sphi 0, %s232
      %s247 = sphi 0, %s233
      %s251 = sphi 0, %s251
      %s253 = sphi 0, %s251
      %s254 = sphi 0, %s253
      %s268 = sphi 0, %s254
      %s274 = sphi 0, %s276
      %s277 = sphi 0, %s274
      %s278 = sphi 0, %s277
      %s294 = sphi 0, %s278
    $region4: #{tpu_custom_call.1} parent=1 // loop_header_branch
      %26 = sbr.rel (%p24) target = $region8
    $region5: #{tpu_custom_call.1} parent=1 // loop_body
      %s28 = ssub.s32 %s23, 1
      %s29 = ssub.s32 %s23, 2
      %s30 = sadd.s32 %s23, 1
      %s31 = ssub.s32 %s23, %s30
      %p32 = scmp.eq.s32.totalorder %s31, 0
      %s34 = sadd.s32 %s33, 1
      %s35 = scalar_select %p32, %s33, %s34
      %p38 = pneg %p32
      %p39 = scmp.eq.s32.totalorder %s23, 1
      %p40 = por %p38, %p39
      %p41 = scmp.ne.s32.totalorder %s33, %s36
      %p42 = scmp.eq.s32.totalorder %s23, 0
      %p43 = por %p41, %p42
      %p44 = scmp.ne.s32.totalorder %s33, %s36
      %p45 = scmp.eq.s32.totalorder %s28, 1
      %p46 = por %p44, %p45
      %p47 = scmp.ne.s32.totalorder %s36, %s37
      %p48 = scmp.eq.s32.totalorder %s28, 0
      %p49 = por %p47, %p48
      %p50 = scmp.ne.s32.totalorder %s36, %s37
      %p51 = scmp.eq.s32.totalorder %s29, 1
      %p52 = por %p50, %p51
      %p54 = scmp.ne.s32.totalorder %s37, %s53
      %p55 = scmp.eq.s32.totalorder %s29, 0
      %p56 = por %p54, %p55
      %s57 = ssub.s32 %s23, %s30
      %p58 = scmp.eq.s32.totalorder %s57, 0
      %s60 = sadd.s32 %s59, 1
      %s61 = scalar_select %p58, %s59, %s60
      %p64 = pneg %p58
      %p65 = scmp.eq.s32.totalorder %s23, 1
      %p66 = por %p64, %p65
      %p67 = scmp.ne.s32.totalorder %s59, %s62
      %p68 = scmp.eq.s32.totalorder %s23, 0
      %p69 = por %p67, %p68
      %p70 = scmp.ne.s32.totalorder %s59, %s62
      %p71 = scmp.eq.s32.totalorder %s28, 1
      %p72 = por %p70, %p71
      %p73 = scmp.ne.s32.totalorder %s62, %s63
      %p74 = scmp.eq.s32.totalorder %s28, 0
      %p75 = por %p73, %p74
      %p76 = scmp.ne.s32.totalorder %s62, %s63
      %p77 = scmp.eq.s32.totalorder %s29, 1
      %p78 = por %p76, %p77
      %p80 = scmp.ne.s32.totalorder %s63, %s79
      %p81 = scmp.eq.s32.totalorder %s29, 0
      %p82 = por %p80, %p81
      %s84 = sadd.s32 %s83, 1
      %p87 = scmp.eq.s32.totalorder %s23, 1
      %p88 = scmp.ne.s32.totalorder %s83, %s85
      %p89 = scmp.eq.s32.totalorder %s23, 0
      %p90 = por %p88, %p89
      %p91 = scmp.ne.s32.totalorder %s83, %s85
      %p92 = scmp.eq.s32.totalorder %s28, 1
      %p93 = por %p91, %p92
      %p94 = scmp.ne.s32.totalorder %s85, %s86
      %p95 = scmp.eq.s32.totalorder %s28, 0
      %p96 = por %p94, %p95
      %p97 = scmp.ne.s32.totalorder %s85, %s86
      %p98 = scmp.eq.s32.totalorder %s29, 1
      %p99 = por %p97, %p98
      %p101 = scmp.ne.s32.totalorder %s86, %s100
      %p102 = scmp.eq.s32.totalorder %s29, 0
      %p103 = por %p101, %p102
      %s105 = sadd.s32 %s104, 1
      %p108 = scmp.eq.s32.totalorder %s23, 1
      %p109 = scmp.ne.s32.totalorder %s104, %s106
      %p110 = scmp.eq.s32.totalorder %s23, 0
      %p111 = por %p109, %p110
      %p112 = scmp.ne.s32.totalorder %s104, %s106
      %p113 = scmp.eq.s32.totalorder %s28, 1
      %p114 = por %p112, %p113
      %p115 = scmp.ne.s32.totalorder %s106, %s107
      %p116 = scmp.eq.s32.totalorder %s28, 0
      %p117 = por %p115, %p116
      %p118 = scmp.ne.s32.totalorder %s106, %s107
      %p119 = scmp.eq.s32.totalorder %s29, 1
      %p120 = por %p118, %p119
      %p122 = scmp.ne.s32.totalorder %s107, %s121
      %p123 = scmp.eq.s32.totalorder %s29, 0
      %p124 = por %p122, %p123
      %s126 = sadd.s32 %s125, 1
      %p129 = scmp.eq.s32.totalorder %s23, 1
      %p130 = scmp.ne.s32.totalorder %s125, %s127
      %p131 = scmp.eq.s32.totalorder %s23, 0
      %p132 = por %p130, %p131
      %p133 = scmp.ne.s32.totalorder %s125, %s127
      %p134 = scmp.eq.s32.totalorder %s28, 1
      %p135 = por %p133, %p134
      %p136 = scmp.ne.s32.totalorder %s127, %s128
      %p137 = scmp.eq.s32.totalorder %s28, 0
      %p138 = por %p136, %p137
      %p139 = scmp.ne.s32.totalorder %s127, %s128
      %p140 = scmp.eq.s32.totalorder %s29, 1
      %p141 = por %p139, %p140
      %p143 = scmp.ne.s32.totalorder %s128, %s142
      %p144 = scmp.eq.s32.totalorder %s29, 0
      %p145 = por %p143, %p144
      %s147 = sadd.s32 %s146, 1
      %p150 = scmp.eq.s32.totalorder %s23, 1
      %p151 = scmp.ne.s32.totalorder %s146, %s148
      %p152 = scmp.eq.s32.totalorder %s23, 0
      %p153 = por %p151, %p152
      %p154 = scmp.ne.s32.totalorder %s146, %s148
      %p155 = scmp.eq.s32.totalorder %s28, 1
      %p156 = por %p154, %p155
      %p157 = scmp.ne.s32.totalorder %s148, %s149
      %p158 = scmp.eq.s32.totalorder %s28, 0
      %p159 = por %p157, %p158
      %p160 = scmp.ne.s32.totalorder %s148, %s149
      %p161 = scmp.eq.s32.totalorder %s29, 1
      %p162 = por %p160, %p161
      %p164 = scmp.ne.s32.totalorder %s149, %s163
      %p165 = scmp.eq.s32.totalorder %s29, 0
      %p166 = por %p164, %p165
      %s168 = sadd.s32 %s167, 1
      %p171 = scmp.eq.s32.totalorder %s23, 1
      %p172 = scmp.ne.s32.totalorder %s167, %s169
      %p173 = scmp.eq.s32.totalorder %s23, 0
      %p174 = por %p172, %p173
      %p175 = scmp.ne.s32.totalorder %s167, %s169
      %p176 = scmp.eq.s32.totalorder %s28, 1
      %p177 = por %p175, %p176
      %p178 = scmp.ne.s32.totalorder %s169, %s170
      %p179 = scmp.eq.s32.totalorder %s28, 0
      %p180 = por %p178, %p179
      %p181 = scmp.ne.s32.totalorder %s169, %s170
      %p182 = scmp.eq.s32.totalorder %s29, 1
      %p183 = por %p181, %p182
      %p185 = scmp.ne.s32.totalorder %s170, %s184
      %p186 = scmp.eq.s32.totalorder %s29, 0
      %p187 = por %p185, %p186
      %s189 = sadd.s32 %s188, 1
      %p192 = scmp.eq.s32.totalorder %s23, 1
      %p193 = scmp.ne.s32.totalorder %s188, %s190
      %p194 = scmp.eq.s32.totalorder %s23, 0
      %p195 = por %p193, %p194
      %p196 = scmp.ne.s32.totalorder %s188, %s190
      %p197 = scmp.eq.s32.totalorder %s28, 1
      %p198 = por %p196, %p197
      %p199 = scmp.ne.s32.totalorder %s190, %s191
      %p200 = scmp.eq.s32.totalorder %s28, 0
      %p201 = por %p199, %p200
      %p202 = scmp.ne.s32.totalorder %s190, %s191
      %p203 = scmp.eq.s32.totalorder %s29, 1
      %p204 = por %p202, %p203
      %p206 = scmp.ne.s32.totalorder %s191, %s205
      %p207 = scmp.eq.s32.totalorder %s29, 0
      %p208 = por %p206, %p207
      %s210 = sadd.s32 %s209, 1
      %p213 = scmp.eq.s32.totalorder %s23, 1
      %p214 = scmp.ne.s32.totalorder %s209, %s211
      %p215 = scmp.eq.s32.totalorder %s23, 0
      %p216 = por %p214, %p215
      %p217 = scmp.ne.s32.totalorder %s209, %s211
      %p218 = scmp.eq.s32.totalorder %s28, 1
      %p219 = por %p217, %p218
      %p220 = scmp.ne.s32.totalorder %s211, %s212
      %p221 = scmp.eq.s32.totalorder %s28, 0
      %p222 = por %p220, %p221
      %p223 = scmp.ne.s32.totalorder %s211, %s212
      %p224 = scmp.eq.s32.totalorder %s29, 1
      %p225 = por %p223, %p224
      %p227 = scmp.ne.s32.totalorder %s212, %s226
      %p228 = scmp.eq.s32.totalorder %s29, 0
      %p229 = por %p227, %p228
      %s231 = sadd.s32 %s230, 1
      %p234 = scmp.eq.s32.totalorder %s23, 1
      %p235 = scmp.ne.s32.totalorder %s230, %s232
      %p236 = scmp.eq.s32.totalorder %s23, 0
      %p237 = por %p235, %p236
      %p238 = scmp.ne.s32.totalorder %s230, %s232
      %p239 = scmp.eq.s32.totalorder %s28, 1
      %p240 = por %p238, %p239
      %p241 = scmp.ne.s32.totalorder %s232, %s233
      %p242 = scmp.eq.s32.totalorder %s28, 0
      %p243 = por %p241, %p242
      %p244 = scmp.ne.s32.totalorder %s232, %s233
      %p245 = scmp.eq.s32.totalorder %s29, 1
      %p246 = por %p244, %p245
      %p248 = scmp.ne.s32.totalorder %s233, %s247
      %p249 = scmp.eq.s32.totalorder %s29, 0
      %p250 = por %p248, %p249
      %s252 = sadd.s32 %s251, 1
      %p255 = scmp.eq.s32.totalorder %s23, 1
      %p256 = scmp.ne.s32.totalorder %s251, %s253
      %p257 = scmp.eq.s32.totalorder %s23, 0
      %p258 = por %p256, %p257
      %p259 = scmp.ne.s32.totalorder %s251, %s253
      %p260 = scmp.eq.s32.totalorder %s28, 1
      %p261 = por %p259, %p260
      %p262 = scmp.ne.s32.totalorder %s253, %s254
      %p263 = scmp.eq.s32.totalorder %s28, 0
      %p264 = por %p262, %p263
      %p265 = scmp.ne.s32.totalorder %s253, %s254
      %p266 = scmp.eq.s32.totalorder %s29, 1
      %p267 = por %p265, %p266
      %p269 = scmp.ne.s32.totalorder %s254, %s268
      %p270 = scmp.eq.s32.totalorder %s29, 0
      %p271 = por %p269, %p270
      %s272 = ssub.s32 %s23, %s30
      %p273 = scmp.eq.s32.totalorder %s272, 0
      %s275 = sadd.s32 %s274, 1
      %s276 = scalar_select %p273, %s274, %s275
      %p279 = pneg %p273
      %p280 = scmp.eq.s32.totalorder %s23, 1
      %p281 = por %p279, %p280
      %p282 = scmp.ne.s32.totalorder %s274, %s277
      %p283 = scmp.eq.s32.totalorder %s23, 0
      %p284 = por %p282, %p283
      %p285 = scmp.ne.s32.totalorder %s274, %s277
      %p286 = scmp.eq.s32.totalorder %s28, 1
      %p287 = por %p285, %p286
      %p288 = scmp.ne.s32.totalorder %s277, %s278
      %p289 = scmp.eq.s32.totalorder %s28, 0
      %p290 = por %p288, %p289
      %p291 = scmp.ne.s32.totalorder %s277, %s278
      %p292 = scmp.eq.s32.totalorder %s29, 1
      %p293 = por %p291, %p292
      %p295 = scmp.ne.s32.totalorder %s278, %s294
      %p296 = scmp.eq.s32.totalorder %s29, 0
      %p297 = por %p295, %p296
      %p298 = scmp.le.s32.totalorder 1, %s23
      %p299 = scmp.lt.s32.totalorder %s23, 3
      %p300 = pnand %p298, %p299
      %p301 = pneg %p300
      // Predicated region
      $region9: #{tpu_custom_call.1} parent=5 // pred_check
        _
      $region10: #{tpu_custom_call.1} parent=5 // pred_check_branch
        %303 = sbr.rel (%p300) target = $region12
      $region11: #{tpu_custom_call.1} parent=5 // pred_region
        %s304 = ssub.s32 %s23, 1
        // Predicated region
        $region13: #{tpu_custom_call.1} parent=11 // pred_check
          %p305 = pneg %p96
        $region14: #{tpu_custom_call.1} parent=11 // pred_check_branch
          %307 = sbr.rel (%p305) target = $region16
        $region15: #{tpu_custom_call.1} parent=11 // pred_region
          %309 = vsyncadd [#allocation5], 0
          %s310 = sshll.u32 %s2, 4
          %s311 = int_to_ptr.hbm [resolvable:$true] %s310
          %s312 = sshll.u32 [#allocation4], 4
          %s313 = int_to_ptr.vmem [resolvable:$true] %s312
          %318 = dma.hbm_to_vmem [thread:$0]  %s311, 4096, %s313, [#allocation5], 256, 256, 16
        $region16: #{tpu_custom_call.1} parent=11 // pred_fallthru
          _
        // Predicated region
        $region17: #{tpu_custom_call.1} parent=11 // pred_check
          %p319 = pneg %p117
        $region18: #{tpu_custom_call.1} parent=11 // pred_check_branch
          %321 = sbr.rel (%p319) target = $region20
        $region19: #{tpu_custom_call.1} parent=11 // pred_region
          %323 = vsyncadd [#allocation8], 0
          %s325 = sshll.u32 %s3, 4
          %s326 = int_to_ptr.hbm [resolvable:$true] %s325
          %s327 = sshll.u32 [#allocation7], 4
          %s328 = int_to_ptr.vmem [resolvable:$true] %s327
          %330 = dma.hbm_to_vmem [thread:$0]  %s326, 32, %s328, [#allocation8]
        $region20: #{tpu_custom_call.1} parent=11 // pred_fallthru
          _
        // Predicated region
        $region21: #{tpu_custom_call.1} parent=11 // pred_check
          %p331 = pneg %p138
        $region22: #{tpu_custom_call.1} parent=11 // pred_check_branch
          %333 = sbr.rel (%p331) target = $region24
        $region23: #{tpu_custom_call.1} parent=11 // pred_region
          _
        $region24: #{tpu_custom_call.1} parent=11 // pred_fallthru
          _
        // Predicated region
        $region25: #{tpu_custom_call.1} parent=11 // pred_check
          %p334 = pneg %p159
        $region26: #{tpu_custom_call.1} parent=11 // pred_check_branch
          %336 = sbr.rel (%p334) target = $region28
        $region27: #{tpu_custom_call.1} parent=11 // pred_region
          %338 = vsyncadd [#allocation8], 0
          %s340 = sshll.u32 %s5, 4
          %s341 = int_to_ptr.hbm [resolvable:$true] %s340
          %s342 = sshll.u32 [#allocation9], 4
          %s343 = int_to_ptr.vmem [resolvable:$true] %s342
          %345 = dma.hbm_to_vmem [thread:$0]  %s341, 64, %s343, [#allocation8]
        $region28: #{tpu_custom_call.1} parent=11 // pred_fallthru
          _
        // Predicated region
        $region29: #{tpu_custom_call.1} parent=11 // pred_check
          %p346 = pneg %p180
        $region30: #{tpu_custom_call.1} parent=11 // pred_check_branch
          %348 = sbr.rel (%p346) target = $region32
        $region31: #{tpu_custom_call.1} parent=11 // pred_region
          %350 = vsyncadd [#allocation11], 0
          %s351 = sshll.u32 %s6, 4
          %s352 = int_to_ptr.hbm [resolvable:$true] %s351
          %s353 = sshll.u32 [#allocation10], 4
          %s354 = int_to_ptr.vmem [resolvable:$true] %s353
          %359 = dma.hbm_to_vmem [thread:$0]  %s352, 2048, %s354, [#allocation11], 128, 128, 8
        $region32: #{tpu_custom_call.1} parent=11 // pred_fallthru
          _
        // Predicated region
        $region33: #{tpu_custom_call.1} parent=11 // pred_check
          %p360 = pneg %p201
        $region34: #{tpu_custom_call.1} parent=11 // pred_check_branch
          %362 = sbr.rel (%p360) target = $region36
        $region35: #{tpu_custom_call.1} parent=11 // pred_region
          %364 = vsyncadd [#allocation11], 0
          %s365 = sshll.u32 %s7, 4
          %s366 = int_to_ptr.hbm [resolvable:$true] %s365
          %s367 = sshll.u32 [#allocation12], 4
          %s368 = int_to_ptr.vmem [resolvable:$true] %s367
          %373 = dma.hbm_to_vmem [thread:$0]  %s366, 2048, %s368, [#allocation11], 128, 128, 8
        $region36: #{tpu_custom_call.1} parent=11 // pred_fallthru
          _
        // Predicated region
        $region37: #{tpu_custom_call.1} parent=11 // pred_check
          %p374 = pneg %p222
        $region38: #{tpu_custom_call.1} parent=11 // pred_check_branch
          %376 = sbr.rel (%p374) target = $region40
        $region39: #{tpu_custom_call.1} parent=11 // pred_region
          _
        $region40: #{tpu_custom_call.1} parent=11 // pred_fallthru
          _
        // Predicated region
        $region41: #{tpu_custom_call.1} parent=11 // pred_check
          %p377 = pneg %p243
        $region42: #{tpu_custom_call.1} parent=11 // pred_check_branch
          %379 = sbr.rel (%p377) target = $region44
        $region43: #{tpu_custom_call.1} parent=11 // pred_region
          _
        $region44: #{tpu_custom_call.1} parent=11 // pred_fallthru
          _
        // Predicated region
        $region45: #{tpu_custom_call.1} parent=11 // pred_check
          %p380 = pneg %p264
        $region46: #{tpu_custom_call.1} parent=11 // pred_check_branch
          %382 = sbr.rel (%p380) target = $region48
        $region47: #{tpu_custom_call.1} parent=11 // pred_region
          _
        $region48: #{tpu_custom_call.1} parent=11 // pred_fallthru
          _
      $region12: #{tpu_custom_call.1} parent=5 // pred_fallthru
        _
      %p383 = scmp.lt.s32.totalorder %s23, 2
      // Predicated region
      $region49: #{tpu_custom_call.1} parent=5 // pred_check
        %p384 = pneg %p383
      $region50: #{tpu_custom_call.1} parent=5 // pred_check_branch
        %386 = sbr.rel (%p384) target = $region52
      $region51: #{tpu_custom_call.1} parent=5 // pred_region
        // Predicated region
        $region53: #{tpu_custom_call.1} parent=51 // pred_check
          %p387 = pneg %p43
        $region54: #{tpu_custom_call.1} parent=51 // pred_check_branch
          %389 = sbr.rel (%p387) target = $region56
        $region55: #{tpu_custom_call.1} parent=51 // pred_region
          %p390 = scmp.lt.s32.totalorder %s23, 1
          %s391 = scalar_select %p390, %s23, 1
          %s392 = smul.addr %s391, 8
          %s393 = scalar_lea.vmem %s0, %s392
        $region56: #{tpu_custom_call.1} parent=51 // pred_fallthru
          _
        // Predicated region
        $region57: #{tpu_custom_call.1} parent=51 // pred_check
          %p394 = pneg %p69
        $region58: #{tpu_custom_call.1} parent=51 // pred_check_branch
          %396 = sbr.rel (%p394) target = $region60
        $region59: #{tpu_custom_call.1} parent=51 // pred_region
          %p397 = scmp.lt.s32.totalorder %s23, 1
          %s398 = scalar_select %p397, %s23, 1
          %s399 = smul.addr %s398, 8
          %s400 = scalar_lea.vmem %s1, %s399
        $region60: #{tpu_custom_call.1} parent=51 // pred_fallthru
          _
      $region52: #{tpu_custom_call.1} parent=5 // pred_fallthru
        _
      %p401 = scmp.le.s32.totalorder 1, %s23
      %p402 = scmp.lt.s32.totalorder %s23, 3
      %p403 = pnand %p401, %p402
      %p404 = pneg %p403
      // Predicated region
      $region61: #{tpu_custom_call.1} parent=5 // pred_check
        _
      $region62: #{tpu_custom_call.1} parent=5 // pred_check_branch
        %406 = sbr.rel (%p403) target = $region64
      $region63: #{tpu_custom_call.1} parent=5 // pred_region
        %s407 = ssub.s32 %s23, 1
        // Predicated region
        $region65: #{tpu_custom_call.1} parent=63 // pred_check
          %p408 = pneg %p96
        $region66: #{tpu_custom_call.1} parent=63 // pred_check_branch
          %410 = sbr.rel (%p408) target = $region68
        $region67: #{tpu_custom_call.1} parent=63 // pred_region
          %412 = dma.done [#allocation5], 4096
        $region68: #{tpu_custom_call.1} parent=63 // pred_fallthru
          _
        // Predicated region
        $region69: #{tpu_custom_call.1} parent=63 // pred_check
          %p413 = pneg %p117
        $region70: #{tpu_custom_call.1} parent=63 // pred_check_branch
          %415 = sbr.rel (%p413) target = $region72
        $region71: #{tpu_custom_call.1} parent=63 // pred_region
          %417 = dma.done [#allocation8], 32
        $region72: #{tpu_custom_call.1} parent=63 // pred_fallthru
          _
        // Predicated region
        $region73: #{tpu_custom_call.1} parent=63 // pred_check
          %p418 = pneg %p159
        $region74: #{tpu_custom_call.1} parent=63 // pred_check_branch
          %420 = sbr.rel (%p418) target = $region76
        $region75: #{tpu_custom_call.1} parent=63 // pred_region
          %422 = dma.done [#allocation8], 64
        $region76: #{tpu_custom_call.1} parent=63 // pred_fallthru
          _
        // Predicated region
        $region77: #{tpu_custom_call.1} parent=63 // pred_check
          %p423 = pneg %p180
        $region78: #{tpu_custom_call.1} parent=63 // pred_check_branch
          %425 = sbr.rel (%p423) target = $region80
        $region79: #{tpu_custom_call.1} parent=63 // pred_region
          %427 = dma.done [#allocation11], 2048
        $region80: #{tpu_custom_call.1} parent=63 // pred_fallthru
          _
        // Predicated region
        $region81: #{tpu_custom_call.1} parent=63 // pred_check
          %p428 = pneg %p201
        $region82: #{tpu_custom_call.1} parent=63 // pred_check_branch
          %430 = sbr.rel (%p428) target = $region84
        $region83: #{tpu_custom_call.1} parent=63 // pred_region
          %432 = dma.done [#allocation11], 2048
        $region84: #{tpu_custom_call.1} parent=63 // pred_fallthru
          _
        %p433 = scmp.lt.s32.totalorder %s28, 1
        %s434 = scalar_select %p433, %s28, 1
        %s435 = smul.addr %s434, 8
        %s436 = scalar_lea.vmem %s0, %s435
        %p437 = pneg %p49
        %p438 = pneg %p46
        %p439 = scmp.lt.s32.totalorder %s28, 1
        %s440 = scalar_select %p439, %s28, 1
        %s441 = smul.addr %s440, 8
        %s442 = scalar_lea.vmem %s1, %s441
        %p443 = pneg %p75
        %p444 = pneg %p72
        %p445 = pneg %p96
        %p446 = pneg %p93
        %p447 = pneg %p117
        %p448 = pneg %p114
        %p449 = pneg %p138
        %p450 = pneg %p135
        %p451 = pneg %p159
        %p452 = pneg %p156
        %p453 = pneg %p180
        %p454 = pneg %p177
        %p455 = pneg %p201
        %p456 = pneg %p198
        %p457 = pneg %p222
        %p458 = pneg %p219
        %p459 = pneg %p243
        %p460 = pneg %p240
        %p461 = pneg %p264
        %p462 = pneg %p261
        %p463 = pneg %p290
        %p464 = pneg %p287
        %s465 = sand.u32 %s277, 1
        %s466 = scalar_lea.sflag [#allocation6], %s465
        %s467 = sand.u32 %s277, 1
        %s468 = smul.addr %s467, 8
        %s469 = scalar_lea.vmem [#allocation13], %s468
        %p470 = scmp.lt.s32.totalorder %s28, 1
        %s471 = scalar_select %p470, %s28, 1
        %s472 = smul.addr %s471, 8
        %s473 = scalar_lea.vmem %s0, %s472
        %p474 = scmp.lt.s32.totalorder %s28, 1
        %s475 = scalar_select %p474, %s28, 1
        %s476 = smul.addr %s475, 8
        %s477 = scalar_lea.vmem %s1, %s476
        %v478 = vld [vmem:[%s473] sm:$0xff]
        %v479 = vld [vmem:[#allocation4] sm:$0xff]
        %v480 = vld [vmem:[#allocation4 + $0x8] sm:$0xff]
        %v481 = vld [vmem:[#allocation4 + $0x10] sm:$0xff]
        %v482 = vld [vmem:[#allocation4 + $0x18] sm:$0xff]
        %v483 = vld [vmem:[#allocation4 + $0x20] sm:$0xff]
        %v484 = vld [vmem:[#allocation4 + $0x28] sm:$0xff]
        %v485 = vld [vmem:[#allocation4 + $0x30] sm:$0xff]
        %v486 = vld [vmem:[#allocation4 + $0x38] sm:$0xff]
        %v487 = vld [vmem:[#allocation4 + $0x40] sm:$0xff]
        %v488 = vld [vmem:[#allocation4 + $0x48] sm:$0xff]
        %v489 = vld [vmem:[#allocation4 + $0x50] sm:$0xff]
        %v490 = vld [vmem:[#allocation4 + $0x58] sm:$0xff]
        %v491 = vld [vmem:[#allocation4 + $0x60] sm:$0xff]
        %v492 = vld [vmem:[#allocation4 + $0x68] sm:$0xff]
        %v493 = vld [vmem:[#allocation4 + $0x70] sm:$0xff]
        %v494 = vld [vmem:[#allocation4 + $0x78] sm:$0xff]
        %v495 = vld [vmem:[#allocation4 + $0x80] sm:$0xff]
        %v496 = vld [vmem:[#allocation4 + $0x88] sm:$0xff]
        %v497 = vld [vmem:[#allocation4 + $0x90] sm:$0xff]
        %v498 = vld [vmem:[#allocation4 + $0x98] sm:$0xff]
        %v499 = vld [vmem:[#allocation4 + $0xa0] sm:$0xff]
        %v500 = vld [vmem:[#allocation4 + $0xa8] sm:$0xff]
        %v501 = vld [vmem:[#allocation4 + $0xb0] sm:$0xff]
        %v502 = vld [vmem:[#allocation4 + $0xb8] sm:$0xff]
        %v503 = vld [vmem:[#allocation4 + $0xc0] sm:$0xff]
        %v504 = vld [vmem:[#allocation4 + $0xc8] sm:$0xff]
        %v505 = vld [vmem:[#allocation4 + $0xd0] sm:$0xff]
        %v506 = vld [vmem:[#allocation4 + $0xd8] sm:$0xff]
        %v507 = vld [vmem:[#allocation4 + $0xe0] sm:$0xff]
        %v508 = vld [vmem:[#allocation4 + $0xe8] sm:$0xff]
        %v509 = vld [vmem:[#allocation4 + $0xf0] sm:$0xff]
        %v510 = vld [vmem:[#allocation4 + $0xf8] sm:$0xff]
        %v511 = vld [vmem:[#allocation7] sm:$0x3]
        %v513 = vperm.slane %v511, 0
        %v514 = vperm.slane %v511, 1
        %517 = vmatpush.msra.mxu0 %v509
        %518 = vmatpush.msra.mxu0 %v507
        %519 = vmatpush.msra.mxu0 %v505
        %520 = vmatpush.msra.mxu0 %v503
        %521 = vmatpush.msra.mxu0 %v501
        %522 = vmatpush.msra.mxu0 %v499
        %523 = vmatpush.msra.mxu0 %v497
        %524 = vmatpush.msra.mxu0 %v495
        %525 = vmatpush.msra.mxu0 %v493
        %526 = vmatpush.msra.mxu0 %v491
        %527 = vmatpush.msra.mxu0 %v489
        %528 = vmatpush.msra.mxu0 %v487
        %529 = vmatpush.msra.mxu0 %v485
        %530 = vmatpush.msra.mxu0 %v483
        %531 = vmatpush.msra.mxu0 %v481
        %532 = vmatpush.msra.mxu0 %v479
        %533 = vmatmul.f32.gmra.mxu0 %v478
        %v534 = vpop.f32.mrf.mxu0
        %v535 = vadd.f32 %v513, %v534
        %536 = vdwg.mxu0
        %537 = vmatpush.msra.mxu0 %v510
        %538 = vmatpush.msra.mxu0 %v508
        %539 = vmatpush.msra.mxu0 %v506
        %540 = vmatpush.msra.mxu0 %v504
        %541 = vmatpush.msra.mxu0 %v502
        %542 = vmatpush.msra.mxu0 %v500
        %543 = vmatpush.msra.mxu0 %v498
        %544 = vmatpush.msra.mxu0 %v496
        %545 = vmatpush.msra.mxu0 %v494
        %546 = vmatpush.msra.mxu0 %v492
        %547 = vmatpush.msra.mxu0 %v490
        %548 = vmatpush.msra.mxu0 %v488
        %549 = vmatpush.msra.mxu0 %v486
        %550 = vmatpush.msra.mxu0 %v484
        %551 = vmatpush.msra.mxu0 %v482
        %552 = vmatpush.msra.mxu0 %v480
        %553 = vmatmul.f32.gmra.mxu0 %v478
        %v554 = vpop.f32.mrf.mxu0
        %v555 = vadd.f32 %v514, %v554
        %556 = vdwg.mxu0
        %557 = vst [vmem:[#allocation2] sm:$0xff] %v535
        %558 = vst [vmem:[#allocation3] sm:$0xff] %v555
        %v559 = vld [vmem:[%s4] sm:$0x1]
        %v560 = vld [vmem:[#allocation9] sm:$0x1]
        %v561 = vld [vmem:[%s477] sm:$0x1]
        %v562 = vld [vmem:[#allocation2] sm:$0x1]
        %564 = vset.pattern.permute.xlu0 0
        %565 = vperm.xlu0 %564, %v561
        %v566 = vpop.permute.xlu0 %565
        %v568 = vmul.f32 %v562, %v566
        %v569 = vld [vmem:[#allocation3] sm:$0x1]
        %v570 = vmul.f32 %v569, %v566
        %v571 = vmul.f32 %v559, %v568
        %v572 = vmul.f32 %v560, %v570
        %v573 = vsub.f32 %v571, %v572
        %v574 = vmul.f32 %v559, %v570
        %v575 = vmul.f32 %v560, %v568
        %v576 = vadd.f32 %v574, %v575
        %v577 = vld [vmem:[#allocation2 + $0x1] sm:$0x1]
        %v578 = vadd.f32 %v577, %v573
        %579 = vst [vmem:[#allocation2 + $0x1] sm:$0x1] %v578
        %v580 = vld [vmem:[#allocation3 + $0x1] sm:$0x1]
        %v581 = vadd.f32 %v580, %v576
        %582 = vst [vmem:[#allocation3 + $0x1] sm:$0x1] %v581
        %v583 = vld [vmem:[%s477 + $0x2] sm:$0x1]
        %v584 = vld [vmem:[#allocation2 + $0x2] sm:$0x1]
        %586 = vset.pattern.permute.xlu0 0
        %587 = vperm.xlu0 %586, %v583
        %v588 = vpop.permute.xlu0 %587
        %v590 = vmul.f32 %v584, %v588
        %v591 = vld [vmem:[#allocation3 + $0x2] sm:$0x1]
        %v592 = vmul.f32 %v591, %v588
        %v593 = vmul.f32 %v559, %v590
        %v594 = vmul.f32 %v560, %v592
        %v595 = vsub.f32 %v593, %v594
        %v596 = vmul.f32 %v559, %v592
        %v597 = vmul.f32 %v560, %v590
        %v598 = vadd.f32 %v596, %v597
        %v599 = vld [vmem:[#allocation2 + $0x3] sm:$0x1]
        %v600 = vadd.f32 %v599, %v595
        %601 = vst [vmem:[#allocation2 + $0x3] sm:$0x1] %v600
        %v602 = vld [vmem:[#allocation3 + $0x3] sm:$0x1]
        %v603 = vadd.f32 %v602, %v598
        %604 = vst [vmem:[#allocation3 + $0x3] sm:$0x1] %v603
        %v605 = vld [vmem:[%s477 + $0x4] sm:$0x1]
        %v606 = vld [vmem:[#allocation2 + $0x4] sm:$0x1]
        %608 = vset.pattern.permute.xlu0 0
        %609 = vperm.xlu0 %608, %v605
        %v610 = vpop.permute.xlu0 %609
        %v612 = vmul.f32 %v606, %v610
        %v613 = vld [vmem:[#allocation3 + $0x4] sm:$0x1]
        %v614 = vmul.f32 %v613, %v610
        %v615 = vmul.f32 %v559, %v612
        %v616 = vmul.f32 %v560, %v614
        %v617 = vsub.f32 %v615, %v616
        %v618 = vmul.f32 %v559, %v614
        %v619 = vmul.f32 %v560, %v612
        %v620 = vadd.f32 %v618, %v619
        %v621 = vld [vmem:[#allocation2 + $0x5] sm:$0x1]
        %v622 = vadd.f32 %v621, %v617
        %623 = vst [vmem:[#allocation2 + $0x5] sm:$0x1] %v622
        %v624 = vld [vmem:[#allocation3 + $0x5] sm:$0x1]
        %v625 = vadd.f32 %v624, %v620
        %626 = vst [vmem:[#allocation3 + $0x5] sm:$0x1] %v625
        %v627 = vld [vmem:[%s477 + $0x6] sm:$0x1]
        %v628 = vld [vmem:[#allocation2 + $0x6] sm:$0x1]
        %630 = vset.pattern.permute.xlu0 0
        %631 = vperm.xlu0 %630, %v627
        %v632 = vpop.permute.xlu0 %631
        %v634 = vmul.f32 %v628, %v632
        %v635 = vld [vmem:[#allocation3 + $0x6] sm:$0x1]
        %v636 = vmul.f32 %v635, %v632
        %v637 = vmul.f32 %v559, %v634
        %v638 = vmul.f32 %v560, %v636
        %v639 = vsub.f32 %v637, %v638
        %v640 = vmul.f32 %v559, %v636
        %v641 = vmul.f32 %v560, %v634
        %v642 = vadd.f32 %v640, %v641
        %v643 = vld [vmem:[#allocation2 + $0x7] sm:$0x1]
        %v644 = vadd.f32 %v643, %v639
        %645 = vst [vmem:[#allocation2 + $0x7] sm:$0x1] %v644
        %v646 = vld [vmem:[#allocation3 + $0x7] sm:$0x1]
        %v647 = vadd.f32 %v646, %v642
        %648 = vst [vmem:[#allocation3 + $0x7] sm:$0x1] %v647
        %v649 = vld [vmem:[%s4] sm:$0x3]
        %v650 = vld [vmem:[#allocation9] sm:$0x3]
        %v651 = vld [vmem:[%s477 + $0x1] sm:$0x1]
        %v652 = vld [vmem:[#allocation2 + $0x1] sm:$0x1]
        %654 = vset.pattern.permute.xlu0 0
        %655 = vperm.xlu0 %654, %v651
        %v656 = vpop.permute.xlu0 %655
        %v658 = vmul.f32 %v652, %v656
        %v659 = vld [vmem:[#allocation3 + $0x1] sm:$0x1]
        %v660 = vmul.f32 %v659, %v656
        %v661 = vperm.slane %v658, 0
        %v662 = vmul.f32 %v649, %v661
        %v663 = vperm.slane %v660, 0
        %v664 = vmul.f32 %v650, %v663
        %v665 = vsub.f32 %v662, %v664
        %v666 = vmul.f32 %v649, %v663
        %v667 = vmul.f32 %v650, %v661
        %v668 = vadd.f32 %v666, %v667
        %v669 = vld [vmem:[#allocation2 + $0x2] sm:$0x3]
        %v670 = vadd.f32 %v669, %v665
        %671 = vst [vmem:[#allocation2 + $0x2] sm:$0x3] %v670
        %v672 = vld [vmem:[#allocation3 + $0x2] sm:$0x3]
        %v673 = vadd.f32 %v672, %v668
        %674 = vst [vmem:[#allocation3 + $0x2] sm:$0x3] %v673
        %v675 = vld [vmem:[%s477 + $0x5] sm:$0x1]
        %v676 = vld [vmem:[#allocation2 + $0x5] sm:$0x1]
        %678 = vset.pattern.permute.xlu0 0
        %679 = vperm.xlu0 %678, %v675
        %v680 = vpop.permute.xlu0 %679
        %v682 = vmul.f32 %v676, %v680
        %v683 = vld [vmem:[#allocation3 + $0x5] sm:$0x1]
        %v684 = vmul.f32 %v683, %v680
        %v685 = vperm.slane %v682, 0
        %v686 = vmul.f32 %v649, %v685
        %v687 = vperm.slane %v684, 0
        %v688 = vmul.f32 %v650, %v687
        %v689 = vsub.f32 %v686, %v688
        %v690 = vmul.f32 %v649, %v687
        %v691 = vmul.f32 %v650, %v685
        %v692 = vadd.f32 %v690, %v691
        %v693 = vld [vmem:[#allocation2 + $0x6] sm:$0x3]
        %v694 = vadd.f32 %v693, %v689
        %695 = vst [vmem:[#allocation2 + $0x6] sm:$0x3] %v694
        %v696 = vld [vmem:[#allocation3 + $0x6] sm:$0x3]
        %v697 = vadd.f32 %v696, %v692
        %698 = vst [vmem:[#allocation3 + $0x6] sm:$0x3] %v697
        %v699 = vld [vmem:[%s4] sm:$0xf]
        %v700 = vld [vmem:[#allocation9] sm:$0xf]
        %v701 = vld [vmem:[%s477 + $0x3] sm:$0x1]
        %v702 = vld [vmem:[#allocation2 + $0x3] sm:$0x1]
        %704 = vset.pattern.permute.xlu0 0
        %705 = vperm.xlu0 %704, %v701
        %v706 = vpop.permute.xlu0 %705
        %v708 = vmul.f32 %v702, %v706
        %v709 = vld [vmem:[#allocation3 + $0x3] sm:$0x1]
        %v710 = vmul.f32 %v709, %v706
        %v711 = vperm.slane %v708, 0
        %v712 = vmul.f32 %v699, %v711
        %v713 = vperm.slane %v710, 0
        %v714 = vmul.f32 %v700, %v713
        %v715 = vsub.f32 %v712, %v714
        %v716 = vmul.f32 %v699, %v713
        %v717 = vmul.f32 %v700, %v711
        %v718 = vadd.f32 %v716, %v717
        %v719 = vld [vmem:[#allocation2 + $0x4] sm:$0xf]
        %v720 = vadd.f32 %v719, %v715
        %721 = vst [vmem:[#allocation2 + $0x4] sm:$0xf] %v720
        %v722 = vld [vmem:[#allocation3 + $0x4] sm:$0xf]
        %v723 = vadd.f32 %v722, %v718
        %724 = vst [vmem:[#allocation3 + $0x4] sm:$0xf] %v723
        %v725 = vld [vmem:[#allocation2] sm:$0xff]
        %v726 = vld [vmem:[#allocation3] sm:$0xff]
        %v727 = vld [vmem:[#allocation10] sm:$0xff]
        %v728 = vld [vmem:[#allocation10 + $0x8] sm:$0xff]
        %v729 = vld [vmem:[#allocation10 + $0x10] sm:$0xff]
        %v730 = vld [vmem:[#allocation10 + $0x18] sm:$0xff]
        %v731 = vld [vmem:[#allocation10 + $0x20] sm:$0xff]
        %v732 = vld [vmem:[#allocation10 + $0x28] sm:$0xff]
        %v733 = vld [vmem:[#allocation10 + $0x30] sm:$0xff]
        %v734 = vld [vmem:[#allocation10 + $0x38] sm:$0xff]
        %v735 = vld [vmem:[#allocation10 + $0x40] sm:$0xff]
        %v736 = vld [vmem:[#allocation10 + $0x48] sm:$0xff]
        %v737 = vld [vmem:[#allocation10 + $0x50] sm:$0xff]
        %v738 = vld [vmem:[#allocation10 + $0x58] sm:$0xff]
        %v739 = vld [vmem:[#allocation10 + $0x60] sm:$0xff]
        %v740 = vld [vmem:[#allocation10 + $0x68] sm:$0xff]
        %v741 = vld [vmem:[#allocation10 + $0x70] sm:$0xff]
        %v742 = vld [vmem:[#allocation10 + $0x78] sm:$0xff]
        %743 = vmatpush.msra.mxu0 %v742
        %744 = vmatpush.msra.mxu0 %v741
        %745 = vmatpush.msra.mxu0 %v740
        %746 = vmatpush.msra.mxu0 %v739
        %747 = vmatpush.msra.mxu0 %v738
        %748 = vmatpush.msra.mxu0 %v737
        %749 = vmatpush.msra.mxu0 %v736
        %750 = vmatpush.msra.mxu0 %v735
        %751 = vmatpush.msra.mxu0 %v734
        %752 = vmatpush.msra.mxu0 %v733
        %753 = vmatpush.msra.mxu0 %v732
        %754 = vmatpush.msra.mxu0 %v731
        %755 = vmatpush.msra.mxu0 %v730
        %756 = vmatpush.msra.mxu0 %v729
        %757 = vmatpush.msra.mxu0 %v728
        %758 = vmatpush.msra.mxu0 %v727
        %759 = vmatmul.f32.gmra.mxu0 %v725
        %v760 = vpop.f32.mrf.mxu0
        %v761 = vadd.f32 0.0, %v760
        %762 = vdwg.mxu0
        %v763 = vld [vmem:[#allocation12] sm:$0xff]
        %v764 = vld [vmem:[#allocation12 + $0x8] sm:$0xff]
        %v765 = vld [vmem:[#allocation12 + $0x10] sm:$0xff]
        %v766 = vld [vmem:[#allocation12 + $0x18] sm:$0xff]
        %v767 = vld [vmem:[#allocation12 + $0x20] sm:$0xff]
        %v768 = vld [vmem:[#allocation12 + $0x28] sm:$0xff]
        %v769 = vld [vmem:[#allocation12 + $0x30] sm:$0xff]
        %v770 = vld [vmem:[#allocation12 + $0x38] sm:$0xff]
        %v771 = vld [vmem:[#allocation12 + $0x40] sm:$0xff]
        %v772 = vld [vmem:[#allocation12 + $0x48] sm:$0xff]
        %v773 = vld [vmem:[#allocation12 + $0x50] sm:$0xff]
        %v774 = vld [vmem:[#allocation12 + $0x58] sm:$0xff]
        %v775 = vld [vmem:[#allocation12 + $0x60] sm:$0xff]
        %v776 = vld [vmem:[#allocation12 + $0x68] sm:$0xff]
        %v777 = vld [vmem:[#allocation12 + $0x70] sm:$0xff]
        %v778 = vld [vmem:[#allocation12 + $0x78] sm:$0xff]
        %779 = vmatpush.msra.mxu0 %v778
        %780 = vmatpush.msra.mxu0 %v777
        %781 = vmatpush.msra.mxu0 %v776
        %782 = vmatpush.msra.mxu0 %v775
        %783 = vmatpush.msra.mxu0 %v774
        %784 = vmatpush.msra.mxu0 %v773
        %785 = vmatpush.msra.mxu0 %v772
        %786 = vmatpush.msra.mxu0 %v771
        %787 = vmatpush.msra.mxu0 %v770
        %788 = vmatpush.msra.mxu0 %v769
        %789 = vmatpush.msra.mxu0 %v768
        %790 = vmatpush.msra.mxu0 %v767
        %791 = vmatpush.msra.mxu0 %v766
        %792 = vmatpush.msra.mxu0 %v765
        %793 = vmatpush.msra.mxu0 %v764
        %794 = vmatpush.msra.mxu0 %v763
        %795 = vmatmul.f32.gmra.mxu0 %v726
        %v796 = vpop.f32.mrf.mxu0
        %v797 = vadd.f32 0.0, %v796
        %798 = vdwg.mxu0
        %v799 = vsub.f32 %v761, %v797
        %v800 = vld [vmem:[%s8] sm:$0x1]
        %v802 = vperm.slane %v800, 0
        %v804 = vadd.f32 %v799, %v802
        %v805 = vld [vmem:[%s473] sm:$0xff]
        %v806 = vadd.f32 %v804, %v805
        %807 = vadd.xlane.f32.xlu0 %v806
        %v808 = vpop.xlane.xlu0 %807
        %v809 = vmul.f32 %v808, 0.25
        %v810 = vlaneseq
        %v811 = vand.u32 %v810, 127
        %v812 = vsub.f32 %v806, %v809
        %vm813 = vcmp.lt.s32.totalorder %v811, 4
        %v814 = vsel %vm813, 1, 0
        %v815 = vcvt.s32.f32 %v814
        %v816 = vmul.f32 %v812, %v815
        %v817 = vmul.f32 %v816, %v816
        %818 = vadd.xlane.f32.xlu0 %v817
        %v819 = vpop.xlane.xlu0 %818
        %v820 = vmul.f32 %v819, 0.25
        %v821 = vadd.f32 %v820, 1e-05
        %v822 = vrsqrt.pop %v821
        %v823 = vmul.f32 %v822, %v821
        %v824 = vmul.f32 %v823, %v822
        %v825 = vmul.f32 0.5, %v824
        %v826 = vsub.f32 1.5, %v825
        %v827 = vmul.f32 %v822, %v826
        %vm828 = vweird.f32 %v821
        %vm829 = vweird.f32 %v822
        %vm830 = vmor %vm828, %vm829
        %v831 = vsel %vm830, %v822, %v827
        %v832 = vmul.f32 %v816, %v831
        %v833 = vld [vmem:[%s9] sm:$0x1]
        %v835 = vperm.slane %v833, 0
        %v837 = vmul.f32 %v832, %v835
        %v838 = vld [vmem:[%s10] sm:$0x1]
        %v840 = vperm.slane %v838, 0
        %v842 = vadd.f32 %v837, %v840
        %843 = vst [vmem:[%s469] sm:$0xff] %v842
        %s844 = sand.u32 %s277, 1
        %s845 = scalar_lea.sflag [#allocation6], %s844
        %s846 = sand.u32 %s277, 1
        %s847 = smul.addr %s846, 8
        %s848 = scalar_lea.vmem [#allocation13], %s847
        // Predicated region
        $region85: #{tpu_custom_call.1} parent=63 // pred_check
          %p849 = pneg %p287
        $region86: #{tpu_custom_call.1} parent=63 // pred_check_branch
          %851 = sbr.rel (%p849) target = $region88
        $region87: #{tpu_custom_call.1} parent=63 // pred_region
          %853 = vsyncadd %s845, 0
          %s854 = smul.addr %s28, 8
          %s855 = scalar_lea.hbm %s11, %s854
          %s857 = sshll.u32 %s848, 4
          %s858 = int_to_ptr.vmem [resolvable:$true] %s857
          %s859 = sshll.u32 %s855, 4
          %s860 = int_to_ptr.hbm [resolvable:$true] %s859
          %862 = dma.vmem_to_hbm [thread:$0]  %s858, 128, %s860, %s845
        $region88: #{tpu_custom_call.1} parent=63 // pred_fallthru
          _
      $region64: #{tpu_custom_call.1} parent=5 // pred_fallthru
        _
      %p863 = scmp.le.s32.totalorder 2, %s23
      // Predicated region
      $region89: #{tpu_custom_call.1} parent=5 // pred_check
        %p864 = pneg %p863
      $region90: #{tpu_custom_call.1} parent=5 // pred_check_branch
        %866 = sbr.rel (%p864) target = $region92
      $region91: #{tpu_custom_call.1} parent=5 // pred_region
        %s867 = ssub.s32 %s23, 2
        // Predicated region
        $region93: #{tpu_custom_call.1} parent=91 // pred_check
          %p868 = pneg %p293
        $region94: #{tpu_custom_call.1} parent=91 // pred_check_branch
          %870 = sbr.rel (%p868) target = $region96
        $region95: #{tpu_custom_call.1} parent=91 // pred_region
          %s871 = sand.u32 %s278, 1
          %s872 = scalar_lea.sflag [#allocation6], %s871
          %s873 = sand.u32 %s278, 1
          %s874 = smul.addr %s873, 8
          %s875 = scalar_lea.vmem [#allocation13], %s874
          %877 = dma.done %s872, 128
        $region96: #{tpu_custom_call.1} parent=91 // pred_fallthru
          _
      $region92: #{tpu_custom_call.1} parent=5 // pred_fallthru
        _
    $region6: #{tpu_custom_call.1} parent=1 // loop_footer
      %s27 = sadd.s32 1, %s23
    $region7: #{tpu_custom_call.1} parent=1 // loop_footer_branch
      %22 = sbr.rel target = $region3
    $region8: #{tpu_custom_call.1} parent=1 // loop_exit
      _
    %878 = vsyncpa [#allocation5], 1
    %s879 = scalar_lea.sflag [#allocation5], 1
    %880 = vsyncpa %s879, 1
    %881 = vsyncpa [#allocation8], 1
    %882 = vsyncpa [#allocation11], 1
    %883 = vsyncpa [#allocation6], 1
    %s884 = scalar_lea.sflag [#allocation6], 1
    %885 = vsyncpa %s884, 1

</llo_original>
